<compile_context>
chip_gen: v6e
topology: v6e:2x2x1
jax: 0.10.0
libtpu: 0.0.40
codegen_flags: <defaults>
</compile_context>

<pallas_src>
import jax
import jax.numpy as jnp
from jax import lax
from jax.experimental import pallas as pl
from jax.experimental.pallas import tpu as pltpu

KSIZE = 7
PAD = 3
LANES = 128
SUBLANES = 8


def _round_up(x, m):
    return ((x + m - 1) // m) * m


def _largest_divisor_leq(n, cap):
    d = max(1, min(n, cap))
    while n % d:
        d -= 1
    return d


def _pick_chan_block(c, cap):
    # Largest divisor of c that is <= cap and (a multiple of 8 or c itself),
    # so the input block's sublane dim satisfies the (8,128) tiling rule.
    for d in range(min(c, cap), 0, -1):
        if c % d == 0 and (d == c or d % SUBLANES == 0):
            return d
    return c


def spatial_attention(x, conv_weight, conv_bias, *,
                      max_batch_block=8, max_chan_block=16, flat_chunk=512):
    """x: (N, C, H, W). conv_weight: (1, 2, 7, 7). conv_bias: (1,).
    Returns the spatial attention map, shape (N, 1, H, W), float32."""
    N, C, H, W = x.shape
    HW = H * W
    itemsize = jnp.dtype(x.dtype).itemsize

    # --- tile selection ------------------------------------------------------
    nb = _largest_divisor_leq(N, max_batch_block)
    if N >= 2 and N // nb < 2:
        # keep the "parallel" batch axis at extent >= 2 (v7x has 2 TensorCores)
        nb = _largest_divisor_leq(N, max(1, N // 2))
    ct = _pick_chan_block(C, max_chan_block)

    def _in_block_bytes(nb_, ct_):
        # double-buffered input tile, with (8,128) layout padding
        return 2 * nb_ * _round_up(ct_, SUBLANES) * _round_up(HW, LANES) * itemsize

    budget = 16 << 20   # keeps the pipeline comfortably inside v7x's 64 MiB VMEM
    while _in_block_bytes(nb, ct) > budget:
        if ct > SUBLANES:
            smaller = _pick_chan_block(C, ct // 2)
            if smaller < ct:
                ct = smaller
                continue
        if nb > 1:
            nb = _largest_divisor_leq(N, max(1, nb // 2))
            continue
        break

    g_steps = N // nb
    k_steps = C // ct

    # --- flat conv geometry --------------------------------------------------
    # The [avg | max] maps stay flat (H*W on lanes).  Tap (ki,kj) becomes a lane
    # shift of (ki-3)*W + (kj-3); zero halos of `halo` lanes on each side supply
    # the vertical zero padding, a per-kj column mask supplies the horizontal one.
    halo = _round_up(PAD * W + PAD, LANES)   # aligned so the data store is lane-aligned
    width = halo + HW + halo
    fchunk = min(_round_up(flat_chunk, LANES), _round_up(HW, LANES))

    w_flat = conv_weight.astype(jnp.float32).reshape(-1)    # (2*7*7,), layout [cin, kh, kw]
    bias = conv_bias.astype(jnp.float32).reshape(-1)         # (1,)
    inv_c = 1.0 / float(C)

    # colmask[kj, 0, f] = 1 iff output column (f mod W) has an in-image
    # horizontal source for tap kj, i.e. 0 <= (f mod W) + kj - 3 < W.
    cols = jnp.arange(HW, dtype=jnp.int32) % W
    offs = jnp.arange(KSIZE, dtype=jnp.int32)[:, None] - PAD
    colmask = ((cols[None, :] + offs >= 0) & (cols[None, :] + offs < W))
    colmask = colmask.astype(jnp.float32).reshape(KSIZE, 1, HW)

    def kernel(x_ref, w_ref, b_ref, mask_ref, o_ref, sum_ref, max_ref, base_ref):
        # x_ref:    (nb, ct, HW)   VMEM   lane-dense batch/channel tile
        # w_ref:    (98,)          SMEM   flattened conv weight
        # b_ref:    (1,)           SMEM   conv bias
        # mask_ref: (7, 1, HW)     VMEM   per-kj column-validity mask
        # o_ref:    (nb, HW)       VMEM   attention map for this batch block
        # sum_ref/max_ref: (nb,HW) VMEM   running channel-reduction accumulators
        # base_ref: (2, nb, width) VMEM   zero-haloed flat [avg, max] maps
        t = pl.program_id(1)

        x = x_ref[...].astype(jnp.float32)       # (nb, ct, HW)
        part_sum = jnp.sum(x, axis=1)            # (nb, HW)
        part_max = jnp.max(x, axis=1)            # (nb, HW)

        @pl.when(t == 0)
        def _init():
            sum_ref[...] = part_sum
            max_ref[...] = part_max

        @pl.when(t > 0)
        def _accumulate():
            sum_ref[...] = sum_ref[...] + part_sum
            max_ref[...] = jnp.maximum(max_ref[...], part_max)

        @pl.when(t == pl.num_programs(1) - 1)
        def _finalize():
            # Zero only the halos; the data region is fully overwritten below,
            # so no stale scratch can leak regardless of megacore sharding.
            zhalo = jnp.zeros((nb, halo), jnp.float32)
            for c in range(2):
                base_ref[c, :, pl.ds(0, halo)] = zhalo
                base_ref[c, :, pl.ds(halo + HW, halo)] = zhalo
            base_ref[0, :, pl.ds(halo, HW)] = sum_ref[...] * inv_c
            base_ref[1, :, pl.ds(halo, HW)] = max_ref[...]

            # 2x7x7 conv as static lane-shifted reads of the flat base, fully
            # unrolled and chunked along the flat axis so the f32 accumulator
            # stays in a handful of vregs; one lane-dense store per chunk.
            for f0 in range(0, HW, fchunk):
                fc = min(fchunk, HW - f0)
                acc = jnp.full((nb, fc), b_ref[0], dtype=jnp.float32)
                for kj in range(KSIZE):
                    m = mask_ref[kj, :, pl.ds(f0, fc)]          # (1, fc)
                    tmp = jnp.zeros((nb, fc), jnp.float32)
                    for c in range(2):
                        for ki in range(KSIZE):
                            wt = w_ref[c * KSIZE * KSIZE + ki * KSIZE + kj]
                            start = halo + f0 + (ki - PAD) * W + (kj - PAD)
                            tmp = tmp + wt * base_ref[c, :, pl.ds(start, fc)]
                    acc = acc + m * tmp
                o_ref[:, pl.ds(f0, fc)] = jax.nn.sigmoid(acc)

    # --- VMEM budgeting / compiler params -------------------------------------
    hw_pad = _round_up(HW, LANES)
    nb_pad = _round_up(nb, SUBLANES)
    est = (_in_block_bytes(nb, ct)                           # double-buffered x tile
           + 2 * nb_pad * hw_pad * 4                         # double-buffered output tile
           + 2 * nb_pad * hw_pad * 4                         # sum + max scratch
           + 2 * nb_pad * _round_up(width, LANES) * 4        # base scratch
           + 2 * KSIZE * SUBLANES * hw_pad * 4)              # column masks
    vmem_limit = int(min(max(2 * est, 32 << 20), 48 << 20))

    out_flat = pl.pallas_call(
        kernel,
        out_shape=jax.ShapeDtypeStruct((g_steps, nb, HW), jnp.float32),
        grid=(g_steps, k_steps),
        in_specs=[
            pl.BlockSpec((nb, ct, HW), lambda g, t: (g, t, 0)),
            pl.BlockSpec(memory_space=pltpu.MemorySpace.SMEM),
            pl.BlockSpec(memory_space=pltpu.MemorySpace.SMEM),
            pl.BlockSpec((KSIZE, 1, HW), lambda g, t: (0, 0, 0)),
        ],
        out_specs=pl.BlockSpec((None, nb, HW), lambda g, t: (g, 0, 0)),
        scratch_shapes=[
            pltpu.VMEM((nb, HW), jnp.float32),
            pltpu.VMEM((nb, HW), jnp.float32),
            pltpu.VMEM((2, nb, width), jnp.float32),
        ],
        compiler_params=pltpu.CompilerParams(
            dimension_semantics=("parallel", "arbitrary"),
            vmem_limit_bytes=vmem_limit),
    )(x.reshape(N, C, HW), w_flat, bias, colmask)

    return out_flat.reshape(N, 1, H, W)


def spatial_attention_ref(x, conv_weight, conv_bias):
    """Pure-JAX reference for verification."""
    avg = jnp.mean(x, axis=1, keepdims=True)
    mx = jnp.max(x, axis=1, keepdims=True)
    att = jnp.concatenate([avg, mx], axis=1)                 # (N,2,H,W)
    out = lax.conv_general_dilated(
        att, conv_weight, window_strides=(1, 1),
        padding=((PAD, PAD), (PAD, PAD)),
        dimension_numbers=("NCHW", "OIHW", "NCHW"))
    return jax.nn.sigmoid(out + conv_bias.reshape(1, -1, 1, 1))


if __name__ == "__main__":
    key = jax.random.PRNGKey(0)
    kx, kw, kb = jax.random.split(key, 3)

    N, C, H, W = 2, 4, 16, 16
    x = jax.random.normal(kx, (N, C, H, W), dtype=jnp.float32)

    # Deterministic conv parameters (synthetic; not loaded from a checkpoint).
    fan_in = 2 * KSIZE * KSIZE
    bound = 1.0 / (fan_in ** 0.5)
    conv_weight = jax.random.uniform(kw, (1, 2, KSIZE, KSIZE),
                                     minval=-bound, maxval=bound,
                                     dtype=jnp.float32)
    conv_bias = jax.random.uniform(kb, (1,), minval=-bound, maxval=bound,
                                   dtype=jnp.float32)

    run = jax.jit(spatial_attention)
    out = jax.block_until_ready(run(x, conv_weight, conv_bias))
    ref = jax.block_until_ready(spatial_attention_ref(x, conv_weight, conv_bias))

    assert out.shape == (N, 1, H, W)
    assert jnp.allclose(out, ref, rtol=1e-4, atol=1e-5), \
        float(jnp.max(jnp.abs(out - ref)))

    print("KERNEL_OK")
</pallas_src>

<mosaic_0001>
module attributes {stable_mosaic.version = 11 : i64} {
  func.func @kernel(%arg0: i32, %arg1: i32, %arg2: memref<1x4x256xf32, #tpu.memory_space<vmem>>, %arg3: memref<98xf32, #tpu.memory_space<smem>>, %arg4: memref<1xf32, #tpu.memory_space<smem>>, %arg5: memref<7x1x256xf32, #tpu.memory_space<vmem>>, %arg6: memref<1x1x256xf32, #tpu.memory_space<vmem>>, %arg7: memref<1x256xf32, #tpu.memory_space<vmem>>, %arg8: memref<1x256xf32, #tpu.memory_space<vmem>>, %arg9: memref<2x1x512xf32, #tpu.memory_space<vmem>>) attributes {dimension_semantics = [#tpu.dimension_semantics<parallel>, #tpu.dimension_semantics<arbitrary>], iteration_bounds = array<i64: 2, 1>, scalar_prefetch = 0 : i64, scratch_operands = 3 : i64, tpu.core_type = #tpu.core_type<tc>, window_params = [{transform_indices = @transform_0, window_bounds = array<i64: 1, 4, 256>}, {transform_indices = @transform_1, window_bounds = array<i64: 98>}, {transform_indices = @transform_2, window_bounds = array<i64: 1>}, {pipeline_mode = #tpu.pipeline_mode<synchronous>, transform_indices = @transform_3, window_bounds = array<i64: 7, 1, 256>}, {transform_indices = @transform_4, window_bounds = array<i64: 1, 1, 256>}]} {
    %c0 = arith.constant 0 : index
    %c0_0 = arith.constant 0 : index
    %c0_1 = arith.constant 0 : index
    %0 = vector.load %arg2[%c0, %c0_0, %c0_1] : memref<1x4x256xf32, #tpu.memory_space<vmem>>, vector<1x4x256xf32>
    %cst = arith.constant dense<0.000000e+00> : vector<1x256xf32>
    %1 = vector.multi_reduction <add>, %0, %cst [1] : vector<1x4x256xf32> to vector<1x256xf32>
    %cst_2 = arith.constant dense<0xFF800000> : vector<1x256xf32>
    %2 = vector.multi_reduction <maximumf>, %0, %cst_2 [1] : vector<1x4x256xf32> to vector<1x256xf32>
    %c0_i32 = arith.constant 0 : i32
    %3 = arith.cmpi eq, %arg1, %c0_i32 : i32
    %4 = arith.extui %3 : i1 to i32
    %c0_i32_3 = arith.constant 0 : i32
    %5 = arith.cmpi ne, %4, %c0_i32_3 : i32
    scf.if %5 {
      %c0_8 = arith.constant 0 : index
      %c0_9 = arith.constant 0 : index
      %12 = vector.load %arg7[%c0_8, %c0_9] : memref<1x256xf32, #tpu.memory_space<vmem>>, vector<1x256xf32>
      tpu.vector_store %arg7[%c0_8, %c0_9], %1 {strides = array<i32>} : memref<1x256xf32, #tpu.memory_space<vmem>>, vector<1x256xf32>,
      %c0_10 = arith.constant 0 : index
      %c0_11 = arith.constant 0 : index
      %13 = vector.load %arg8[%c0_10, %c0_11] : memref<1x256xf32, #tpu.memory_space<vmem>>, vector<1x256xf32>
      tpu.vector_store %arg8[%c0_10, %c0_11], %2 {strides = array<i32>} : memref<1x256xf32, #tpu.memory_space<vmem>>, vector<1x256xf32>,
    } else {
    }
    %c0_i32_4 = arith.constant 0 : i32
    %6 = arith.cmpi sgt, %arg1, %c0_i32_4 : i32
    %7 = arith.extui %6 : i1 to i32
    %c0_i32_5 = arith.constant 0 : i32
    %8 = arith.cmpi ne, %7, %c0_i32_5 : i32
    scf.if %8 {
      %c0_8 = arith.constant 0 : index
      %c0_9 = arith.constant 0 : index
      %12 = vector.load %arg7[%c0_8, %c0_9] : memref<1x256xf32, #tpu.memory_space<vmem>>, vector<1x256xf32>
      %13 = arith.addf %12, %1 : vector<1x256xf32>
      %c0_10 = arith.constant 0 : index
      %c0_11 = arith.constant 0 : index
      %14 = vector.load %arg7[%c0_10, %c0_11] : memref<1x256xf32, #tpu.memory_space<vmem>>, vector<1x256xf32>
      tpu.vector_store %arg7[%c0_10, %c0_11], %13 {strides = array<i32>} : memref<1x256xf32, #tpu.memory_space<vmem>>, vector<1x256xf32>,
      %c0_12 = arith.constant 0 : index
      %c0_13 = arith.constant 0 : index
      %15 = vector.load %arg8[%c0_12, %c0_13] : memref<1x256xf32, #tpu.memory_space<vmem>>, vector<1x256xf32>
      %16 = arith.maximumf %15, %2 : vector<1x256xf32>
      %c0_14 = arith.constant 0 : index
      %c0_15 = arith.constant 0 : index
      %17 = vector.load %arg8[%c0_14, %c0_15] : memref<1x256xf32, #tpu.memory_space<vmem>>, vector<1x256xf32>
      tpu.vector_store %arg8[%c0_14, %c0_15], %16 {strides = array<i32>} : memref<1x256xf32, #tpu.memory_space<vmem>>, vector<1x256xf32>,
    } else {
    }
    %c0_i32_6 = arith.constant 0 : i32
    %9 = arith.cmpi eq, %arg1, %c0_i32_6 : i32
    %10 = arith.extui %9 : i1 to i32
    %c0_i32_7 = arith.constant 0 : i32
    %11 = arith.cmpi ne, %10, %c0_i32_7 : i32
    scf.if %11 {
      %cst_8 = arith.constant 0.000000e+00 : f32
      %12 = vector.broadcast %cst_8 : f32 to vector<1x128xf32>
      %c0_9 = arith.constant 0 : index
      %c0_10 = arith.constant 0 : index
      %c0_11 = arith.constant 0 : index
      %13 = vector.load %arg9[%c0_9, %c0_10, %c0_11] : memref<2x1x512xf32, #tpu.memory_space<vmem>>, vector<1x1x128xf32>
      %14 = vector.shape_cast %13 : vector<1x1x128xf32> to vector<1x128xf32>
      %15 = vector.shape_cast %12 : vector<1x128xf32> to vector<1x1x128xf32>
      tpu.vector_store %arg9[%c0_9, %c0_10, %c0_11], %15 {strides = array<i32>} : memref<2x1x512xf32, #tpu.memory_space<vmem>>, vector<1x1x128xf32>,
      %c0_12 = arith.constant 0 : index
      %c0_13 = arith.constant 0 : index
      %c384 = arith.constant 384 : index
      %16 = vector.load %arg9[%c0_12, %c0_13, %c384] : memref<2x1x512xf32, #tpu.memory_space<vmem>>, vector<1x1x128xf32>
      %17 = vector.shape_cast %16 : vector<1x1x128xf32> to vector<1x128xf32>
      %18 = vector.shape_cast %12 : vector<1x128xf32> to vector<1x1x128xf32>
      tpu.vector_store %arg9[%c0_12, %c0_13, %c384], %18 {strides = array<i32>} : memref<2x1x512xf32, #tpu.memory_space<vmem>>, vector<1x1x128xf32>,
      %c1 = arith.constant 1 : index
      %c0_14 = arith.constant 0 : index
      %c0_15 = arith.constant 0 : index
      %19 = vector.load %arg9[%c1, %c0_14, %c0_15] : memref<2x1x512xf32, #tpu.memory_space<vmem>>, vector<1x1x128xf32>
      %20 = vector.shape_cast %19 : vector<1x1x128xf32> to vector<1x128xf32>
      %21 = vector.shape_cast %12 : vector<1x128xf32> to vector<1x1x128xf32>
      tpu.vector_store %arg9[%c1, %c0_14, %c0_15], %21 {strides = array<i32>} : memref<2x1x512xf32, #tpu.memory_space<vmem>>, vector<1x1x128xf32>,
      %c1_16 = arith.constant 1 : index
      %c0_17 = arith.constant 0 : index
      %c384_18 = arith.constant 384 : index
      %22 = vector.load %arg9[%c1_16, %c0_17, %c384_18] : memref<2x1x512xf32, #tpu.memory_space<vmem>>, vector<1x1x128xf32>
      %23 = vector.shape_cast %22 : vector<1x1x128xf32> to vector<1x128xf32>
      %24 = vector.shape_cast %12 : vector<1x128xf32> to vector<1x1x128xf32>
      tpu.vector_store %arg9[%c1_16, %c0_17, %c384_18], %24 {strides = array<i32>} : memref<2x1x512xf32, #tpu.memory_space<vmem>>, vector<1x1x128xf32>,
      %c0_19 = arith.constant 0 : index
      %c0_20 = arith.constant 0 : index
      %25 = vector.load %arg7[%c0_19, %c0_20] : memref<1x256xf32, #tpu.memory_space<vmem>>, vector<1x256xf32>
      %cst_21 = arith.constant 2.500000e-01 : f32
      %26 = vector.broadcast %cst_21 : f32 to vector<1x256xf32>
      %27 = arith.mulf %25, %26 : vector<1x256xf32>
      %c0_22 = arith.constant 0 : index
      %c0_23 = arith.constant 0 : index
      %c128 = arith.constant 128 : index
      %28 = vector.load %arg9[%c0_22, %c0_23, %c128] : memref<2x1x512xf32, #tpu.memory_space<vmem>>, vector<1x1x256xf32>
      %29 = vector.shape_cast %28 : vector<1x1x256xf32> to vector<1x256xf32>
      %30 = vector.shape_cast %27 : vector<1x256xf32> to vector<1x1x256xf32>
      tpu.vector_store %arg9[%c0_22, %c0_23, %c128], %30 {strides = array<i32>} : memref<2x1x512xf32, #tpu.memory_space<vmem>>, vector<1x1x256xf32>,
      %c0_24 = arith.constant 0 : index
      %c0_25 = arith.constant 0 : index
      %31 = vector.load %arg8[%c0_24, %c0_25] : memref<1x256xf32, #tpu.memory_space<vmem>>, vector<1x256xf32>
      %c1_26 = arith.constant 1 : index
      %c0_27 = arith.constant 0 : index
      %c128_28 = arith.constant 128 : index
      %32 = vector.load %arg9[%c1_26, %c0_27, %c128_28] : memref<2x1x512xf32, #tpu.memory_space<vmem>>, vector<1x1x256xf32>
      %33 = vector.shape_cast %32 : vector<1x1x256xf32> to vector<1x256xf32>
      %34 = vector.shape_cast %31 : vector<1x256xf32> to vector<1x1x256xf32>
      tpu.vector_store %arg9[%c1_26, %c0_27, %c128_28], %34 {strides = array<i32>} : memref<2x1x512xf32, #tpu.memory_space<vmem>>, vector<1x1x256xf32>,
      %c0_29 = arith.constant 0 : index
      %35 = memref.load %arg4[%c0_29] : memref<1xf32, #tpu.memory_space<smem>>
      %36 = vector.broadcast %35 : f32 to vector<1x256xf32>
      %c0_30 = arith.constant 0 : index
      %c0_31 = arith.constant 0 : index
      %c0_32 = arith.constant 0 : index
      %37 = vector.load %arg5[%c0_30, %c0_31, %c0_32] : memref<7x1x256xf32, #tpu.memory_space<vmem>>, vector<1x1x256xf32>
      %38 = vector.shape_cast %37 : vector<1x1x256xf32> to vector<1x256xf32>
      %cst_33 = arith.constant 0.000000e+00 : f32
      %39 = vector.broadcast %cst_33 : f32 to vector<1x256xf32>
      %c0_34 = arith.constant 0 : index
      %40 = memref.load %arg3[%c0_34] : memref<98xf32, #tpu.memory_space<smem>>
      %c0_35 = arith.constant 0 : index
      %c0_36 = arith.constant 0 : index
      %c77 = arith.constant 77 : index
      %41 = vector.load %arg9[%c0_35, %c0_36, %c77] : memref<2x1x512xf32, #tpu.memory_space<vmem>>, vector<1x1x256xf32>
      %42 = vector.shape_cast %41 : vector<1x1x256xf32> to vector<1x256xf32>
      %43 = vector.broadcast %40 : f32 to vector<1x256xf32>
      %44 = arith.mulf %43, %42 : vector<1x256xf32>
      %45 = arith.addf %39, %44 : vector<1x256xf32>
      %c7 = arith.constant 7 : index
      %46 = memref.load %arg3[%c7] : memref<98xf32, #tpu.memory_space<smem>>
      %c0_37 = arith.constant 0 : index
      %c0_38 = arith.constant 0 : index
      %c93 = arith.constant 93 : index
      %47 = vector.load %arg9[%c0_37, %c0_38, %c93] : memref<2x1x512xf32, #tpu.memory_space<vmem>>, vector<1x1x256xf32>
      %48 = vector.shape_cast %47 : vector<1x1x256xf32> to vector<1x256xf32>
      %49 = vector.broadcast %46 : f32 to vector<1x256xf32>
      %50 = arith.mulf %49, %48 : vector<1x256xf32>
      %51 = arith.addf %45, %50 : vector<1x256xf32>
      %c14 = arith.constant 14 : index
      %52 = memref.load %arg3[%c14] : memref<98xf32, #tpu.memory_space<smem>>
      %c0_39 = arith.constant 0 : index
      %c0_40 = arith.constant 0 : index
      %c109 = arith.constant 109 : index
      %53 = vector.load %arg9[%c0_39, %c0_40, %c109] : memref<2x1x512xf32, #tpu.memory_space<vmem>>, vector<1x1x256xf32>
      %54 = vector.shape_cast %53 : vector<1x1x256xf32> to vector<1x256xf32>
      %55 = vector.broadcast %52 : f32 to vector<1x256xf32>
      %56 = arith.mulf %55, %54 : vector<1x256xf32>
      %57 = arith.addf %51, %56 : vector<1x256xf32>
      %c21 = arith.constant 21 : index
      %58 = memref.load %arg3[%c21] : memref<98xf32, #tpu.memory_space<smem>>
      %c0_41 = arith.constant 0 : index
      %c0_42 = arith.constant 0 : index
      %c125 = arith.constant 125 : index
      %59 = vector.load %arg9[%c0_41, %c0_42, %c125] : memref<2x1x512xf32, #tpu.memory_space<vmem>>, vector<1x1x256xf32>
      %60 = vector.shape_cast %59 : vector<1x1x256xf32> to vector<1x256xf32>
      %61 = vector.broadcast %58 : f32 to vector<1x256xf32>
      %62 = arith.mulf %61, %60 : vector<1x256xf32>
      %63 = arith.addf %57, %62 : vector<1x256xf32>
      %c28 = arith.constant 28 : index
      %64 = memref.load %arg3[%c28] : memref<98xf32, #tpu.memory_space<smem>>
      %c0_43 = arith.constant 0 : index
      %c0_44 = arith.constant 0 : index
      %c141 = arith.constant 141 : index
      %65 = vector.load %arg9[%c0_43, %c0_44, %c141] : memref<2x1x512xf32, #tpu.memory_space<vmem>>, vector<1x1x256xf32>
      %66 = vector.shape_cast %65 : vector<1x1x256xf32> to vector<1x256xf32>
      %67 = vector.broadcast %64 : f32 to vector<1x256xf32>
      %68 = arith.mulf %67, %66 : vector<1x256xf32>
      %69 = arith.addf %63, %68 : vector<1x256xf32>
      %c35 = arith.constant 35 : index
      %70 = memref.load %arg3[%c35] : memref<98xf32, #tpu.memory_space<smem>>
      %c0_45 = arith.constant 0 : index
      %c0_46 = arith.constant 0 : index
      %c157 = arith.constant 157 : index
      %71 = vector.load %arg9[%c0_45, %c0_46, %c157] : memref<2x1x512xf32, #tpu.memory_space<vmem>>, vector<1x1x256xf32>
      %72 = vector.shape_cast %71 : vector<1x1x256xf32> to vector<1x256xf32>
      %73 = vector.broadcast %70 : f32 to vector<1x256xf32>
      %74 = arith.mulf %73, %72 : vector<1x256xf32>
      %75 = arith.addf %69, %74 : vector<1x256xf32>
      %c42 = arith.constant 42 : index
      %76 = memref.load %arg3[%c42] : memref<98xf32, #tpu.memory_space<smem>>
      %c0_47 = arith.constant 0 : index
      %c0_48 = arith.constant 0 : index
      %c173 = arith.constant 173 : index
      %77 = vector.load %arg9[%c0_47, %c0_48, %c173] : memref<2x1x512xf32, #tpu.memory_space<vmem>>, vector<1x1x256xf32>
      %78 = vector.shape_cast %77 : vector<1x1x256xf32> to vector<1x256xf32>
      %79 = vector.broadcast %76 : f32 to vector<1x256xf32>
      %80 = arith.mulf %79, %78 : vector<1x256xf32>
      %81 = arith.addf %75, %80 : vector<1x256xf32>
      %c49 = arith.constant 49 : index
      %82 = memref.load %arg3[%c49] : memref<98xf32, #tpu.memory_space<smem>>
      %c1_49 = arith.constant 1 : index
      %c0_50 = arith.constant 0 : index
      %c77_51 = arith.constant 77 : index
      %83 = vector.load %arg9[%c1_49, %c0_50, %c77_51] : memref<2x1x512xf32, #tpu.memory_space<vmem>>, vector<1x1x256xf32>
      %84 = vector.shape_cast %83 : vector<1x1x256xf32> to vector<1x256xf32>
      %85 = vector.broadcast %82 : f32 to vector<1x256xf32>
      %86 = arith.mulf %85, %84 : vector<1x256xf32>
      %87 = arith.addf %81, %86 : vector<1x256xf32>
      %c56 = arith.constant 56 : index
      %88 = memref.load %arg3[%c56] : memref<98xf32, #tpu.memory_space<smem>>
      %c1_52 = arith.constant 1 : index
      %c0_53 = arith.constant 0 : index
      %c93_54 = arith.constant 93 : index
      %89 = vector.load %arg9[%c1_52, %c0_53, %c93_54] : memref<2x1x512xf32, #tpu.memory_space<vmem>>, vector<1x1x256xf32>
      %90 = vector.shape_cast %89 : vector<1x1x256xf32> to vector<1x256xf32>
      %91 = vector.broadcast %88 : f32 to vector<1x256xf32>
      %92 = arith.mulf %91, %90 : vector<1x256xf32>
      %93 = arith.addf %87, %92 : vector<1x256xf32>
      %c63 = arith.constant 63 : index
      %94 = memref.load %arg3[%c63] : memref<98xf32, #tpu.memory_space<smem>>
      %c1_55 = arith.constant 1 : index
      %c0_56 = arith.constant 0 : index
      %c109_57 = arith.constant 109 : index
      %95 = vector.load %arg9[%c1_55, %c0_56, %c109_57] : memref<2x1x512xf32, #tpu.memory_space<vmem>>, vector<1x1x256xf32>
      %96 = vector.shape_cast %95 : vector<1x1x256xf32> to vector<1x256xf32>
      %97 = vector.broadcast %94 : f32 to vector<1x256xf32>
      %98 = arith.mulf %97, %96 : vector<1x256xf32>
      %99 = arith.addf %93, %98 : vector<1x256xf32>
      %c70 = arith.constant 70 : index
      %100 = memref.load %arg3[%c70] : memref<98xf32, #tpu.memory_space<smem>>
      %c1_58 = arith.constant 1 : index
      %c0_59 = arith.constant 0 : index
      %c125_60 = arith.constant 125 : index
      %101 = vector.load %arg9[%c1_58, %c0_59, %c125_60] : memref<2x1x512xf32, #tpu.memory_space<vmem>>, vector<1x1x256xf32>
      %102 = vector.shape_cast %101 : vector<1x1x256xf32> to vector<1x256xf32>
      %103 = vector.broadcast %100 : f32 to vector<1x256xf32>
      %104 = arith.mulf %103, %102 : vector<1x256xf32>
      %105 = arith.addf %99, %104 : vector<1x256xf32>
      %c77_61 = arith.constant 77 : index
      %106 = memref.load %arg3[%c77_61] : memref<98xf32, #tpu.memory_space<smem>>
      %c1_62 = arith.constant 1 : index
      %c0_63 = arith.constant 0 : index
      %c141_64 = arith.constant 141 : index
      %107 = vector.load %arg9[%c1_62, %c0_63, %c141_64] : memref<2x1x512xf32, #tpu.memory_space<vmem>>, vector<1x1x256xf32>
      %108 = vector.shape_cast %107 : vector<1x1x256xf32> to vector<1x256xf32>
      %109 = vector.broadcast %106 : f32 to vector<1x256xf32>
      %110 = arith.mulf %109, %108 : vector<1x256xf32>
      %111 = arith.addf %105, %110 : vector<1x256xf32>
      %c84 = arith.constant 84 : index
      %112 = memref.load %arg3[%c84] : memref<98xf32, #tpu.memory_space<smem>>
      %c1_65 = arith.constant 1 : index
      %c0_66 = arith.constant 0 : index
      %c157_67 = arith.constant 157 : index
      %113 = vector.load %arg9[%c1_65, %c0_66, %c157_67] : memref<2x1x512xf32, #tpu.memory_space<vmem>>, vector<1x1x256xf32>
      %114 = vector.shape_cast %113 : vector<1x1x256xf32> to vector<1x256xf32>
      %115 = vector.broadcast %112 : f32 to vector<1x256xf32>
      %116 = arith.mulf %115, %114 : vector<1x256xf32>
      %117 = arith.addf %111, %116 : vector<1x256xf32>
      %c91 = arith.constant 91 : index
      %118 = memref.load %arg3[%c91] : memref<98xf32, #tpu.memory_space<smem>>
      %c1_68 = arith.constant 1 : index
      %c0_69 = arith.constant 0 : index
      %c173_70 = arith.constant 173 : index
      %119 = vector.load %arg9[%c1_68, %c0_69, %c173_70] : memref<2x1x512xf32, #tpu.memory_space<vmem>>, vector<1x1x256xf32>
      %120 = vector.shape_cast %119 : vector<1x1x256xf32> to vector<1x256xf32>
      %121 = vector.broadcast %118 : f32 to vector<1x256xf32>
      %122 = arith.mulf %121, %120 : vector<1x256xf32>
      %123 = arith.addf %117, %122 : vector<1x256xf32>
      %124 = arith.mulf %38, %123 : vector<1x256xf32>
      %125 = arith.addf %36, %124 : vector<1x256xf32>
      %c1_71 = arith.constant 1 : index
      %c0_72 = arith.constant 0 : index
      %c0_73 = arith.constant 0 : index
      %126 = vector.load %arg5[%c1_71, %c0_72, %c0_73] : memref<7x1x256xf32, #tpu.memory_space<vmem>>, vector<1x1x256xf32>
      %127 = vector.shape_cast %126 : vector<1x1x256xf32> to vector<1x256xf32>
      %cst_74 = arith.constant 0.000000e+00 : f32
      %128 = vector.broadcast %cst_74 : f32 to vector<1x256xf32>
      %c1_75 = arith.constant 1 : index
      %129 = memref.load %arg3[%c1_75] : memref<98xf32, #tpu.memory_space<smem>>
      %c0_76 = arith.constant 0 : index
      %c0_77 = arith.constant 0 : index
      %c78 = arith.constant 78 : index
      %130 = vector.load %arg9[%c0_76, %c0_77, %c78] : memref<2x1x512xf32, #tpu.memory_space<vmem>>, vector<1x1x256xf32>
      %131 = vector.shape_cast %130 : vector<1x1x256xf32> to vector<1x256xf32>
      %132 = vector.broadcast %129 : f32 to vector<1x256xf32>
      %133 = arith.mulf %132, %131 : vector<1x256xf32>
      %134 = arith.addf %128, %133 : vector<1x256xf32>
      %c8 = arith.constant 8 : index
      %135 = memref.load %arg3[%c8] : memref<98xf32, #tpu.memory_space<smem>>
      %c0_78 = arith.constant 0 : index
      %c0_79 = arith.constant 0 : index
      %c94 = arith.constant 94 : index
      %136 = vector.load %arg9[%c0_78, %c0_79, %c94] : memref<2x1x512xf32, #tpu.memory_space<vmem>>, vector<1x1x256xf32>
      %137 = vector.shape_cast %136 : vector<1x1x256xf32> to vector<1x256xf32>
      %138 = vector.broadcast %135 : f32 to vector<1x256xf32>
      %139 = arith.mulf %138, %137 : vector<1x256xf32>
      %140 = arith.addf %134, %139 : vector<1x256xf32>
      %c15 = arith.constant 15 : index
      %141 = memref.load %arg3[%c15] : memref<98xf32, #tpu.memory_space<smem>>
      %c0_80 = arith.constant 0 : index
      %c0_81 = arith.constant 0 : index
      %c110 = arith.constant 110 : index
      %142 = vector.load %arg9[%c0_80, %c0_81, %c110] : memref<2x1x512xf32, #tpu.memory_space<vmem>>, vector<1x1x256xf32>
      %143 = vector.shape_cast %142 : vector<1x1x256xf32> to vector<1x256xf32>
      %144 = vector.broadcast %141 : f32 to vector<1x256xf32>
      %145 = arith.mulf %144, %143 : vector<1x256xf32>
      %146 = arith.addf %140, %145 : vector<1x256xf32>
      %c22 = arith.constant 22 : index
      %147 = memref.load %arg3[%c22] : memref<98xf32, #tpu.memory_space<smem>>
      %c0_82 = arith.constant 0 : index
      %c0_83 = arith.constant 0 : index
      %c126 = arith.constant 126 : index
      %148 = vector.load %arg9[%c0_82, %c0_83, %c126] : memref<2x1x512xf32, #tpu.memory_space<vmem>>, vector<1x1x256xf32>
      %149 = vector.shape_cast %148 : vector<1x1x256xf32> to vector<1x256xf32>
      %150 = vector.broadcast %147 : f32 to vector<1x256xf32>
      %151 = arith.mulf %150, %149 : vector<1x256xf32>
      %152 = arith.addf %146, %151 : vector<1x256xf32>
      %c29 = arith.constant 29 : index
      %153 = memref.load %arg3[%c29] : memref<98xf32, #tpu.memory_space<smem>>
      %c0_84 = arith.constant 0 : index
      %c0_85 = arith.constant 0 : index
      %c142 = arith.constant 142 : index
      %154 = vector.load %arg9[%c0_84, %c0_85, %c142] : memref<2x1x512xf32, #tpu.memory_space<vmem>>, vector<1x1x256xf32>
      %155 = vector.shape_cast %154 : vector<1x1x256xf32> to vector<1x256xf32>
      %156 = vector.broadcast %153 : f32 to vector<1x256xf32>
      %157 = arith.mulf %156, %155 : vector<1x256xf32>
      %158 = arith.addf %152, %157 : vector<1x256xf32>
      %c36 = arith.constant 36 : index
      %159 = memref.load %arg3[%c36] : memref<98xf32, #tpu.memory_space<smem>>
      %c0_86 = arith.constant 0 : index
      %c0_87 = arith.constant 0 : index
      %c158 = arith.constant 158 : index
      %160 = vector.load %arg9[%c0_86, %c0_87, %c158] : memref<2x1x512xf32, #tpu.memory_space<vmem>>, vector<1x1x256xf32>
      %161 = vector.shape_cast %160 : vector<1x1x256xf32> to vector<1x256xf32>
      %162 = vector.broadcast %159 : f32 to vector<1x256xf32>
      %163 = arith.mulf %162, %161 : vector<1x256xf32>
      %164 = arith.addf %158, %163 : vector<1x256xf32>
      %c43 = arith.constant 43 : index
      %165 = memref.load %arg3[%c43] : memref<98xf32, #tpu.memory_space<smem>>
      %c0_88 = arith.constant 0 : index
      %c0_89 = arith.constant 0 : index
      %c174 = arith.constant 174 : index
      %166 = vector.load %arg9[%c0_88, %c0_89, %c174] : memref<2x1x512xf32, #tpu.memory_space<vmem>>, vector<1x1x256xf32>
      %167 = vector.shape_cast %166 : vector<1x1x256xf32> to vector<1x256xf32>
      %168 = vector.broadcast %165 : f32 to vector<1x256xf32>
      %169 = arith.mulf %168, %167 : vector<1x256xf32>
      %170 = arith.addf %164, %169 : vector<1x256xf32>
      %c50 = arith.constant 50 : index
      %171 = memref.load %arg3[%c50] : memref<98xf32, #tpu.memory_space<smem>>
      %c1_90 = arith.constant 1 : index
      %c0_91 = arith.constant 0 : index
      %c78_92 = arith.constant 78 : index
      %172 = vector.load %arg9[%c1_90, %c0_91, %c78_92] : memref<2x1x512xf32, #tpu.memory_space<vmem>>, vector<1x1x256xf32>
      %173 = vector.shape_cast %172 : vector<1x1x256xf32> to vector<1x256xf32>
      %174 = vector.broadcast %171 : f32 to vector<1x256xf32>
      %175 = arith.mulf %174, %173 : vector<1x256xf32>
      %176 = arith.addf %170, %175 : vector<1x256xf32>
      %c57 = arith.constant 57 : index
      %177 = memref.load %arg3[%c57] : memref<98xf32, #tpu.memory_space<smem>>
      %c1_93 = arith.constant 1 : index
      %c0_94 = arith.constant 0 : index
      %c94_95 = arith.constant 94 : index
      %178 = vector.load %arg9[%c1_93, %c0_94, %c94_95] : memref<2x1x512xf32, #tpu.memory_space<vmem>>, vector<1x1x256xf32>
      %179 = vector.shape_cast %178 : vector<1x1x256xf32> to vector<1x256xf32>
      %180 = vector.broadcast %177 : f32 to vector<1x256xf32>
      %181 = arith.mulf %180, %179 : vector<1x256xf32>
      %182 = arith.addf %176, %181 : vector<1x256xf32>
      %c64 = arith.constant 64 : index
      %183 = memref.load %arg3[%c64] : memref<98xf32, #tpu.memory_space<smem>>
      %c1_96 = arith.constant 1 : index
      %c0_97 = arith.constant 0 : index
      %c110_98 = arith.constant 110 : index
      %184 = vector.load %arg9[%c1_96, %c0_97, %c110_98] : memref<2x1x512xf32, #tpu.memory_space<vmem>>, vector<1x1x256xf32>
      %185 = vector.shape_cast %184 : vector<1x1x256xf32> to vector<1x256xf32>
      %186 = vector.broadcast %183 : f32 to vector<1x256xf32>
      %187 = arith.mulf %186, %185 : vector<1x256xf32>
      %188 = arith.addf %182, %187 : vector<1x256xf32>
      %c71 = arith.constant 71 : index
      %189 = memref.load %arg3[%c71] : memref<98xf32, #tpu.memory_space<smem>>
      %c1_99 = arith.constant 1 : index
      %c0_100 = arith.constant 0 : index
      %c126_101 = arith.constant 126 : index
      %190 = vector.load %arg9[%c1_99, %c0_100, %c126_101] : memref<2x1x512xf32, #tpu.memory_space<vmem>>, vector<1x1x256xf32>
      %191 = vector.shape_cast %190 : vector<1x1x256xf32> to vector<1x256xf32>
      %192 = vector.broadcast %189 : f32 to vector<1x256xf32>
      %193 = arith.mulf %192, %191 : vector<1x256xf32>
      %194 = arith.addf %188, %193 : vector<1x256xf32>
      %c78_102 = arith.constant 78 : index
      %195 = memref.load %arg3[%c78_102] : memref<98xf32, #tpu.memory_space<smem>>
      %c1_103 = arith.constant 1 : index
      %c0_104 = arith.constant 0 : index
      %c142_105 = arith.constant 142 : index
      %196 = vector.load %arg9[%c1_103, %c0_104, %c142_105] : memref<2x1x512xf32, #tpu.memory_space<vmem>>, vector<1x1x256xf32>
      %197 = vector.shape_cast %196 : vector<1x1x256xf32> to vector<1x256xf32>
      %198 = vector.broadcast %195 : f32 to vector<1x256xf32>
      %199 = arith.mulf %198, %197 : vector<1x256xf32>
      %200 = arith.addf %194, %199 : vector<1x256xf32>
      %c85 = arith.constant 85 : index
      %201 = memref.load %arg3[%c85] : memref<98xf32, #tpu.memory_space<smem>>
      %c1_106 = arith.constant 1 : index
      %c0_107 = arith.constant 0 : index
      %c158_108 = arith.constant 158 : index
      %202 = vector.load %arg9[%c1_106, %c0_107, %c158_108] : memref<2x1x512xf32, #tpu.memory_space<vmem>>, vector<1x1x256xf32>
      %203 = vector.shape_cast %202 : vector<1x1x256xf32> to vector<1x256xf32>
      %204 = vector.broadcast %201 : f32 to vector<1x256xf32>
      %205 = arith.mulf %204, %203 : vector<1x256xf32>
      %206 = arith.addf %200, %205 : vector<1x256xf32>
      %c92 = arith.constant 92 : index
      %207 = memref.load %arg3[%c92] : memref<98xf32, #tpu.memory_space<smem>>
      %c1_109 = arith.constant 1 : index
      %c0_110 = arith.constant 0 : index
      %c174_111 = arith.constant 174 : index
      %208 = vector.load %arg9[%c1_109, %c0_110, %c174_111] : memref<2x1x512xf32, #tpu.memory_space<vmem>>, vector<1x1x256xf32>
      %209 = vector.shape_cast %208 : vector<1x1x256xf32> to vector<1x256xf32>
      %210 = vector.broadcast %207 : f32 to vector<1x256xf32>
      %211 = arith.mulf %210, %209 : vector<1x256xf32>
      %212 = arith.addf %206, %211 : vector<1x256xf32>
      %213 = arith.mulf %127, %212 : vector<1x256xf32>
      %214 = arith.addf %125, %213 : vector<1x256xf32>
      %c2 = arith.constant 2 : index
      %c0_112 = arith.constant 0 : index
      %c0_113 = arith.constant 0 : index
      %215 = vector.load %arg5[%c2, %c0_112, %c0_113] : memref<7x1x256xf32, #tpu.memory_space<vmem>>, vector<1x1x256xf32>
      %216 = vector.shape_cast %215 : vector<1x1x256xf32> to vector<1x256xf32>
      %cst_114 = arith.constant 0.000000e+00 : f32
      %217 = vector.broadcast %cst_114 : f32 to vector<1x256xf32>
      %c2_115 = arith.constant 2 : index
      %218 = memref.load %arg3[%c2_115] : memref<98xf32, #tpu.memory_space<smem>>
      %c0_116 = arith.constant 0 : index
      %c0_117 = arith.constant 0 : index
      %c79 = arith.constant 79 : index
      %219 = vector.load %arg9[%c0_116, %c0_117, %c79] : memref<2x1x512xf32, #tpu.memory_space<vmem>>, vector<1x1x256xf32>
      %220 = vector.shape_cast %219 : vector<1x1x256xf32> to vector<1x256xf32>
      %221 = vector.broadcast %218 : f32 to vector<1x256xf32>
      %222 = arith.mulf %221, %220 : vector<1x256xf32>
      %223 = arith.addf %217, %222 : vector<1x256xf32>
      %c9 = arith.constant 9 : index
      %224 = memref.load %arg3[%c9] : memref<98xf32, #tpu.memory_space<smem>>
      %c0_118 = arith.constant 0 : index
      %c0_119 = arith.constant 0 : index
      %c95 = arith.constant 95 : index
      %225 = vector.load %arg9[%c0_118, %c0_119, %c95] : memref<2x1x512xf32, #tpu.memory_space<vmem>>, vector<1x1x256xf32>
      %226 = vector.shape_cast %225 : vector<1x1x256xf32> to vector<1x256xf32>
      %227 = vector.broadcast %224 : f32 to vector<1x256xf32>
      %228 = arith.mulf %227, %226 : vector<1x256xf32>
      %229 = arith.addf %223, %228 : vector<1x256xf32>
      %c16 = arith.constant 16 : index
      %230 = memref.load %arg3[%c16] : memref<98xf32, #tpu.memory_space<smem>>
      %c0_120 = arith.constant 0 : index
      %c0_121 = arith.constant 0 : index
      %c111 = arith.constant 111 : index
      %231 = vector.load %arg9[%c0_120, %c0_121, %c111] : memref<2x1x512xf32, #tpu.memory_space<vmem>>, vector<1x1x256xf32>
      %232 = vector.shape_cast %231 : vector<1x1x256xf32> to vector<1x256xf32>
      %233 = vector.broadcast %230 : f32 to vector<1x256xf32>
      %234 = arith.mulf %233, %232 : vector<1x256xf32>
      %235 = arith.addf %229, %234 : vector<1x256xf32>
      %c23 = arith.constant 23 : index
      %236 = memref.load %arg3[%c23] : memref<98xf32, #tpu.memory_space<smem>>
      %c0_122 = arith.constant 0 : index
      %c0_123 = arith.constant 0 : index
      %c127 = arith.constant 127 : index
      %237 = vector.load %arg9[%c0_122, %c0_123, %c127] : memref<2x1x512xf32, #tpu.memory_space<vmem>>, vector<1x1x256xf32>
      %238 = vector.shape_cast %237 : vector<1x1x256xf32> to vector<1x256xf32>
      %239 = vector.broadcast %236 : f32 to vector<1x256xf32>
      %240 = arith.mulf %239, %238 : vector<1x256xf32>
      %241 = arith.addf %235, %240 : vector<1x256xf32>
      %c30 = arith.constant 30 : index
      %242 = memref.load %arg3[%c30] : memref<98xf32, #tpu.memory_space<smem>>
      %c0_124 = arith.constant 0 : index
      %c0_125 = arith.constant 0 : index
      %c143 = arith.constant 143 : index
      %243 = vector.load %arg9[%c0_124, %c0_125, %c143] : memref<2x1x512xf32, #tpu.memory_space<vmem>>, vector<1x1x256xf32>
      %244 = vector.shape_cast %243 : vector<1x1x256xf32> to vector<1x256xf32>
      %245 = vector.broadcast %242 : f32 to vector<1x256xf32>
      %246 = arith.mulf %245, %244 : vector<1x256xf32>
      %247 = arith.addf %241, %246 : vector<1x256xf32>
      %c37 = arith.constant 37 : index
      %248 = memref.load %arg3[%c37] : memref<98xf32, #tpu.memory_space<smem>>
      %c0_126 = arith.constant 0 : index
      %c0_127 = arith.constant 0 : index
      %c159 = arith.constant 159 : index
      %249 = vector.load %arg9[%c0_126, %c0_127, %c159] : memref<2x1x512xf32, #tpu.memory_space<vmem>>, vector<1x1x256xf32>
      %250 = vector.shape_cast %249 : vector<1x1x256xf32> to vector<1x256xf32>
      %251 = vector.broadcast %248 : f32 to vector<1x256xf32>
      %252 = arith.mulf %251, %250 : vector<1x256xf32>
      %253 = arith.addf %247, %252 : vector<1x256xf32>
      %c44 = arith.constant 44 : index
      %254 = memref.load %arg3[%c44] : memref<98xf32, #tpu.memory_space<smem>>
      %c0_128 = arith.constant 0 : index
      %c0_129 = arith.constant 0 : index
      %c175 = arith.constant 175 : index
      %255 = vector.load %arg9[%c0_128, %c0_129, %c175] : memref<2x1x512xf32, #tpu.memory_space<vmem>>, vector<1x1x256xf32>
      %256 = vector.shape_cast %255 : vector<1x1x256xf32> to vector<1x256xf32>
      %257 = vector.broadcast %254 : f32 to vector<1x256xf32>
      %258 = arith.mulf %257, %256 : vector<1x256xf32>
      %259 = arith.addf %253, %258 : vector<1x256xf32>
      %c51 = arith.constant 51 : index
      %260 = memref.load %arg3[%c51] : memref<98xf32, #tpu.memory_space<smem>>
      %c1_130 = arith.constant 1 : index
      %c0_131 = arith.constant 0 : index
      %c79_132 = arith.constant 79 : index
      %261 = vector.load %arg9[%c1_130, %c0_131, %c79_132] : memref<2x1x512xf32, #tpu.memory_space<vmem>>, vector<1x1x256xf32>
      %262 = vector.shape_cast %261 : vector<1x1x256xf32> to vector<1x256xf32>
      %263 = vector.broadcast %260 : f32 to vector<1x256xf32>
      %264 = arith.mulf %263, %262 : vector<1x256xf32>
      %265 = arith.addf %259, %264 : vector<1x256xf32>
      %c58 = arith.constant 58 : index
      %266 = memref.load %arg3[%c58] : memref<98xf32, #tpu.memory_space<smem>>
      %c1_133 = arith.constant 1 : index
      %c0_134 = arith.constant 0 : index
      %c95_135 = arith.constant 95 : index
      %267 = vector.load %arg9[%c1_133, %c0_134, %c95_135] : memref<2x1x512xf32, #tpu.memory_space<vmem>>, vector<1x1x256xf32>
      %268 = vector.shape_cast %267 : vector<1x1x256xf32> to vector<1x256xf32>
      %269 = vector.broadcast %266 : f32 to vector<1x256xf32>
      %270 = arith.mulf %269, %268 : vector<1x256xf32>
      %271 = arith.addf %265, %270 : vector<1x256xf32>
      %c65 = arith.constant 65 : index
      %272 = memref.load %arg3[%c65] : memref<98xf32, #tpu.memory_space<smem>>
      %c1_136 = arith.constant 1 : index
      %c0_137 = arith.constant 0 : index
      %c111_138 = arith.constant 111 : index
      %273 = vector.load %arg9[%c1_136, %c0_137, %c111_138] : memref<2x1x512xf32, #tpu.memory_space<vmem>>, vector<1x1x256xf32>
      %274 = vector.shape_cast %273 : vector<1x1x256xf32> to vector<1x256xf32>
      %275 = vector.broadcast %272 : f32 to vector<1x256xf32>
      %276 = arith.mulf %275, %274 : vector<1x256xf32>
      %277 = arith.addf %271, %276 : vector<1x256xf32>
      %c72 = arith.constant 72 : index
      %278 = memref.load %arg3[%c72] : memref<98xf32, #tpu.memory_space<smem>>
      %c1_139 = arith.constant 1 : index
      %c0_140 = arith.constant 0 : index
      %c127_141 = arith.constant 127 : index
      %279 = vector.load %arg9[%c1_139, %c0_140, %c127_141] : memref<2x1x512xf32, #tpu.memory_space<vmem>>, vector<1x1x256xf32>
      %280 = vector.shape_cast %279 : vector<1x1x256xf32> to vector<1x256xf32>
      %281 = vector.broadcast %278 : f32 to vector<1x256xf32>
      %282 = arith.mulf %281, %280 : vector<1x256xf32>
      %283 = arith.addf %277, %282 : vector<1x256xf32>
      %c79_142 = arith.constant 79 : index
      %284 = memref.load %arg3[%c79_142] : memref<98xf32, #tpu.memory_space<smem>>
      %c1_143 = arith.constant 1 : index
      %c0_144 = arith.constant 0 : index
      %c143_145 = arith.constant 143 : index
      %285 = vector.load %arg9[%c1_143, %c0_144, %c143_145] : memref<2x1x512xf32, #tpu.memory_space<vmem>>, vector<1x1x256xf32>
      %286 = vector.shape_cast %285 : vector<1x1x256xf32> to vector<1x256xf32>
      %287 = vector.broadcast %284 : f32 to vector<1x256xf32>
      %288 = arith.mulf %287, %286 : vector<1x256xf32>
      %289 = arith.addf %283, %288 : vector<1x256xf32>
      %c86 = arith.constant 86 : index
      %290 = memref.load %arg3[%c86] : memref<98xf32, #tpu.memory_space<smem>>
      %c1_146 = arith.constant 1 : index
      %c0_147 = arith.constant 0 : index
      %c159_148 = arith.constant 159 : index
      %291 = vector.load %arg9[%c1_146, %c0_147, %c159_148] : memref<2x1x512xf32, #tpu.memory_space<vmem>>, vector<1x1x256xf32>
      %292 = vector.shape_cast %291 : vector<1x1x256xf32> to vector<1x256xf32>
      %293 = vector.broadcast %290 : f32 to vector<1x256xf32>
      %294 = arith.mulf %293, %292 : vector<1x256xf32>
      %295 = arith.addf %289, %294 : vector<1x256xf32>
      %c93_149 = arith.constant 93 : index
      %296 = memref.load %arg3[%c93_149] : memref<98xf32, #tpu.memory_space<smem>>
      %c1_150 = arith.constant 1 : index
      %c0_151 = arith.constant 0 : index
      %c175_152 = arith.constant 175 : index
      %297 = vector.load %arg9[%c1_150, %c0_151, %c175_152] : memref<2x1x512xf32, #tpu.memory_space<vmem>>, vector<1x1x256xf32>
      %298 = vector.shape_cast %297 : vector<1x1x256xf32> to vector<1x256xf32>
      %299 = vector.broadcast %296 : f32 to vector<1x256xf32>
      %300 = arith.mulf %299, %298 : vector<1x256xf32>
      %301 = arith.addf %295, %300 : vector<1x256xf32>
      %302 = arith.mulf %216, %301 : vector<1x256xf32>
      %303 = arith.addf %214, %302 : vector<1x256xf32>
      %c3 = arith.constant 3 : index
      %c0_153 = arith.constant 0 : index
      %c0_154 = arith.constant 0 : index
      %304 = vector.load %arg5[%c3, %c0_153, %c0_154] : memref<7x1x256xf32, #tpu.memory_space<vmem>>, vector<1x1x256xf32>
      %305 = vector.shape_cast %304 : vector<1x1x256xf32> to vector<1x256xf32>
      %cst_155 = arith.constant 0.000000e+00 : f32
      %306 = vector.broadcast %cst_155 : f32 to vector<1x256xf32>
      %c3_156 = arith.constant 3 : index
      %307 = memref.load %arg3[%c3_156] : memref<98xf32, #tpu.memory_space<smem>>
      %c0_157 = arith.constant 0 : index
      %c0_158 = arith.constant 0 : index
      %c80 = arith.constant 80 : index
      %308 = vector.load %arg9[%c0_157, %c0_158, %c80] : memref<2x1x512xf32, #tpu.memory_space<vmem>>, vector<1x1x256xf32>
      %309 = vector.shape_cast %308 : vector<1x1x256xf32> to vector<1x256xf32>
      %310 = vector.broadcast %307 : f32 to vector<1x256xf32>
      %311 = arith.mulf %310, %309 : vector<1x256xf32>
      %312 = arith.addf %306, %311 : vector<1x256xf32>
      %c10 = arith.constant 10 : index
      %313 = memref.load %arg3[%c10] : memref<98xf32, #tpu.memory_space<smem>>
      %c0_159 = arith.constant 0 : index
      %c0_160 = arith.constant 0 : index
      %c96 = arith.constant 96 : index
      %314 = vector.load %arg9[%c0_159, %c0_160, %c96] : memref<2x1x512xf32, #tpu.memory_space<vmem>>, vector<1x1x256xf32>
      %315 = vector.shape_cast %314 : vector<1x1x256xf32> to vector<1x256xf32>
      %316 = vector.broadcast %313 : f32 to vector<1x256xf32>
      %317 = arith.mulf %316, %315 : vector<1x256xf32>
      %318 = arith.addf %312, %317 : vector<1x256xf32>
      %c17 = arith.constant 17 : index
      %319 = memref.load %arg3[%c17] : memref<98xf32, #tpu.memory_space<smem>>
      %c0_161 = arith.constant 0 : index
      %c0_162 = arith.constant 0 : index
      %c112 = arith.constant 112 : index
      %320 = vector.load %arg9[%c0_161, %c0_162, %c112] : memref<2x1x512xf32, #tpu.memory_space<vmem>>, vector<1x1x256xf32>
      %321 = vector.shape_cast %320 : vector<1x1x256xf32> to vector<1x256xf32>
      %322 = vector.broadcast %319 : f32 to vector<1x256xf32>
      %323 = arith.mulf %322, %321 : vector<1x256xf32>
      %324 = arith.addf %318, %323 : vector<1x256xf32>
      %c24 = arith.constant 24 : index
      %325 = memref.load %arg3[%c24] : memref<98xf32, #tpu.memory_space<smem>>
      %c0_163 = arith.constant 0 : index
      %c0_164 = arith.constant 0 : index
      %c128_165 = arith.constant 128 : index
      %326 = vector.load %arg9[%c0_163, %c0_164, %c128_165] : memref<2x1x512xf32, #tpu.memory_space<vmem>>, vector<1x1x256xf32>
      %327 = vector.shape_cast %326 : vector<1x1x256xf32> to vector<1x256xf32>
      %328 = vector.broadcast %325 : f32 to vector<1x256xf32>
      %329 = arith.mulf %328, %327 : vector<1x256xf32>
      %330 = arith.addf %324, %329 : vector<1x256xf32>
      %c31 = arith.constant 31 : index
      %331 = memref.load %arg3[%c31] : memref<98xf32, #tpu.memory_space<smem>>
      %c0_166 = arith.constant 0 : index
      %c0_167 = arith.constant 0 : index
      %c144 = arith.constant 144 : index
      %332 = vector.load %arg9[%c0_166, %c0_167, %c144] : memref<2x1x512xf32, #tpu.memory_space<vmem>>, vector<1x1x256xf32>
      %333 = vector.shape_cast %332 : vector<1x1x256xf32> to vector<1x256xf32>
      %334 = vector.broadcast %331 : f32 to vector<1x256xf32>
      %335 = arith.mulf %334, %333 : vector<1x256xf32>
      %336 = arith.addf %330, %335 : vector<1x256xf32>
      %c38 = arith.constant 38 : index
      %337 = memref.load %arg3[%c38] : memref<98xf32, #tpu.memory_space<smem>>
      %c0_168 = arith.constant 0 : index
      %c0_169 = arith.constant 0 : index
      %c160 = arith.constant 160 : index
      %338 = vector.load %arg9[%c0_168, %c0_169, %c160] : memref<2x1x512xf32, #tpu.memory_space<vmem>>, vector<1x1x256xf32>
      %339 = vector.shape_cast %338 : vector<1x1x256xf32> to vector<1x256xf32>
      %340 = vector.broadcast %337 : f32 to vector<1x256xf32>
      %341 = arith.mulf %340, %339 : vector<1x256xf32>
      %342 = arith.addf %336, %341 : vector<1x256xf32>
      %c45 = arith.constant 45 : index
      %343 = memref.load %arg3[%c45] : memref<98xf32, #tpu.memory_space<smem>>
      %c0_170 = arith.constant 0 : index
      %c0_171 = arith.constant 0 : index
      %c176 = arith.constant 176 : index
      %344 = vector.load %arg9[%c0_170, %c0_171, %c176] : memref<2x1x512xf32, #tpu.memory_space<vmem>>, vector<1x1x256xf32>
      %345 = vector.shape_cast %344 : vector<1x1x256xf32> to vector<1x256xf32>
      %346 = vector.broadcast %343 : f32 to vector<1x256xf32>
      %347 = arith.mulf %346, %345 : vector<1x256xf32>
      %348 = arith.addf %342, %347 : vector<1x256xf32>
      %c52 = arith.constant 52 : index
      %349 = memref.load %arg3[%c52] : memref<98xf32, #tpu.memory_space<smem>>
      %c1_172 = arith.constant 1 : index
      %c0_173 = arith.constant 0 : index
      %c80_174 = arith.constant 80 : index
      %350 = vector.load %arg9[%c1_172, %c0_173, %c80_174] : memref<2x1x512xf32, #tpu.memory_space<vmem>>, vector<1x1x256xf32>
      %351 = vector.shape_cast %350 : vector<1x1x256xf32> to vector<1x256xf32>
      %352 = vector.broadcast %349 : f32 to vector<1x256xf32>
      %353 = arith.mulf %352, %351 : vector<1x256xf32>
      %354 = arith.addf %348, %353 : vector<1x256xf32>
      %c59 = arith.constant 59 : index
      %355 = memref.load %arg3[%c59] : memref<98xf32, #tpu.memory_space<smem>>
      %c1_175 = arith.constant 1 : index
      %c0_176 = arith.constant 0 : index
      %c96_177 = arith.constant 96 : index
      %356 = vector.load %arg9[%c1_175, %c0_176, %c96_177] : memref<2x1x512xf32, #tpu.memory_space<vmem>>, vector<1x1x256xf32>
      %357 = vector.shape_cast %356 : vector<1x1x256xf32> to vector<1x256xf32>
      %358 = vector.broadcast %355 : f32 to vector<1x256xf32>
      %359 = arith.mulf %358, %357 : vector<1x256xf32>
      %360 = arith.addf %354, %359 : vector<1x256xf32>
      %c66 = arith.constant 66 : index
      %361 = memref.load %arg3[%c66] : memref<98xf32, #tpu.memory_space<smem>>
      %c1_178 = arith.constant 1 : index
      %c0_179 = arith.constant 0 : index
      %c112_180 = arith.constant 112 : index
      %362 = vector.load %arg9[%c1_178, %c0_179, %c112_180] : memref<2x1x512xf32, #tpu.memory_space<vmem>>, vector<1x1x256xf32>
      %363 = vector.shape_cast %362 : vector<1x1x256xf32> to vector<1x256xf32>
      %364 = vector.broadcast %361 : f32 to vector<1x256xf32>
      %365 = arith.mulf %364, %363 : vector<1x256xf32>
      %366 = arith.addf %360, %365 : vector<1x256xf32>
      %c73 = arith.constant 73 : index
      %367 = memref.load %arg3[%c73] : memref<98xf32, #tpu.memory_space<smem>>
      %c1_181 = arith.constant 1 : index
      %c0_182 = arith.constant 0 : index
      %c128_183 = arith.constant 128 : index
      %368 = vector.load %arg9[%c1_181, %c0_182, %c128_183] : memref<2x1x512xf32, #tpu.memory_space<vmem>>, vector<1x1x256xf32>
      %369 = vector.shape_cast %368 : vector<1x1x256xf32> to vector<1x256xf32>
      %370 = vector.broadcast %367 : f32 to vector<1x256xf32>
      %371 = arith.mulf %370, %369 : vector<1x256xf32>
      %372 = arith.addf %366, %371 : vector<1x256xf32>
      %c80_184 = arith.constant 80 : index
      %373 = memref.load %arg3[%c80_184] : memref<98xf32, #tpu.memory_space<smem>>
      %c1_185 = arith.constant 1 : index
      %c0_186 = arith.constant 0 : index
      %c144_187 = arith.constant 144 : index
      %374 = vector.load %arg9[%c1_185, %c0_186, %c144_187] : memref<2x1x512xf32, #tpu.memory_space<vmem>>, vector<1x1x256xf32>
      %375 = vector.shape_cast %374 : vector<1x1x256xf32> to vector<1x256xf32>
      %376 = vector.broadcast %373 : f32 to vector<1x256xf32>
      %377 = arith.mulf %376, %375 : vector<1x256xf32>
      %378 = arith.addf %372, %377 : vector<1x256xf32>
      %c87 = arith.constant 87 : index
      %379 = memref.load %arg3[%c87] : memref<98xf32, #tpu.memory_space<smem>>
      %c1_188 = arith.constant 1 : index
      %c0_189 = arith.constant 0 : index
      %c160_190 = arith.constant 160 : index
      %380 = vector.load %arg9[%c1_188, %c0_189, %c160_190] : memref<2x1x512xf32, #tpu.memory_space<vmem>>, vector<1x1x256xf32>
      %381 = vector.shape_cast %380 : vector<1x1x256xf32> to vector<1x256xf32>
      %382 = vector.broadcast %379 : f32 to vector<1x256xf32>
      %383 = arith.mulf %382, %381 : vector<1x256xf32>
      %384 = arith.addf %378, %383 : vector<1x256xf32>
      %c94_191 = arith.constant 94 : index
      %385 = memref.load %arg3[%c94_191] : memref<98xf32, #tpu.memory_space<smem>>
      %c1_192 = arith.constant 1 : index
      %c0_193 = arith.constant 0 : index
      %c176_194 = arith.constant 176 : index
      %386 = vector.load %arg9[%c1_192, %c0_193, %c176_194] : memref<2x1x512xf32, #tpu.memory_space<vmem>>, vector<1x1x256xf32>
      %387 = vector.shape_cast %386 : vector<1x1x256xf32> to vector<1x256xf32>
      %388 = vector.broadcast %385 : f32 to vector<1x256xf32>
      %389 = arith.mulf %388, %387 : vector<1x256xf32>
      %390 = arith.addf %384, %389 : vector<1x256xf32>
      %391 = arith.mulf %305, %390 : vector<1x256xf32>
      %392 = arith.addf %303, %391 : vector<1x256xf32>
      %c4 = arith.constant 4 : index
      %c0_195 = arith.constant 0 : index
      %c0_196 = arith.constant 0 : index
      %393 = vector.load %arg5[%c4, %c0_195, %c0_196] : memref<7x1x256xf32, #tpu.memory_space<vmem>>, vector<1x1x256xf32>
      %394 = vector.shape_cast %393 : vector<1x1x256xf32> to vector<1x256xf32>
      %cst_197 = arith.constant 0.000000e+00 : f32
      %395 = vector.broadcast %cst_197 : f32 to vector<1x256xf32>
      %c4_198 = arith.constant 4 : index
      %396 = memref.load %arg3[%c4_198] : memref<98xf32, #tpu.memory_space<smem>>
      %c0_199 = arith.constant 0 : index
      %c0_200 = arith.constant 0 : index
      %c81 = arith.constant 81 : index
      %397 = vector.load %arg9[%c0_199, %c0_200, %c81] : memref<2x1x512xf32, #tpu.memory_space<vmem>>, vector<1x1x256xf32>
      %398 = vector.shape_cast %397 : vector<1x1x256xf32> to vector<1x256xf32>
      %399 = vector.broadcast %396 : f32 to vector<1x256xf32>
      %400 = arith.mulf %399, %398 : vector<1x256xf32>
      %401 = arith.addf %395, %400 : vector<1x256xf32>
      %c11 = arith.constant 11 : index
      %402 = memref.load %arg3[%c11] : memref<98xf32, #tpu.memory_space<smem>>
      %c0_201 = arith.constant 0 : index
      %c0_202 = arith.constant 0 : index
      %c97 = arith.constant 97 : index
      %403 = vector.load %arg9[%c0_201, %c0_202, %c97] : memref<2x1x512xf32, #tpu.memory_space<vmem>>, vector<1x1x256xf32>
      %404 = vector.shape_cast %403 : vector<1x1x256xf32> to vector<1x256xf32>
      %405 = vector.broadcast %402 : f32 to vector<1x256xf32>
      %406 = arith.mulf %405, %404 : vector<1x256xf32>
      %407 = arith.addf %401, %406 : vector<1x256xf32>
      %c18 = arith.constant 18 : index
      %408 = memref.load %arg3[%c18] : memref<98xf32, #tpu.memory_space<smem>>
      %c0_203 = arith.constant 0 : index
      %c0_204 = arith.constant 0 : index
      %c113 = arith.constant 113 : index
      %409 = vector.load %arg9[%c0_203, %c0_204, %c113] : memref<2x1x512xf32, #tpu.memory_space<vmem>>, vector<1x1x256xf32>
      %410 = vector.shape_cast %409 : vector<1x1x256xf32> to vector<1x256xf32>
      %411 = vector.broadcast %408 : f32 to vector<1x256xf32>
      %412 = arith.mulf %411, %410 : vector<1x256xf32>
      %413 = arith.addf %407, %412 : vector<1x256xf32>
      %c25 = arith.constant 25 : index
      %414 = memref.load %arg3[%c25] : memref<98xf32, #tpu.memory_space<smem>>
      %c0_205 = arith.constant 0 : index
      %c0_206 = arith.constant 0 : index
      %c129 = arith.constant 129 : index
      %415 = vector.load %arg9[%c0_205, %c0_206, %c129] : memref<2x1x512xf32, #tpu.memory_space<vmem>>, vector<1x1x256xf32>
      %416 = vector.shape_cast %415 : vector<1x1x256xf32> to vector<1x256xf32>
      %417 = vector.broadcast %414 : f32 to vector<1x256xf32>
      %418 = arith.mulf %417, %416 : vector<1x256xf32>
      %419 = arith.addf %413, %418 : vector<1x256xf32>
      %c32 = arith.constant 32 : index
      %420 = memref.load %arg3[%c32] : memref<98xf32, #tpu.memory_space<smem>>
      %c0_207 = arith.constant 0 : index
      %c0_208 = arith.constant 0 : index
      %c145 = arith.constant 145 : index
      %421 = vector.load %arg9[%c0_207, %c0_208, %c145] : memref<2x1x512xf32, #tpu.memory_space<vmem>>, vector<1x1x256xf32>
      %422 = vector.shape_cast %421 : vector<1x1x256xf32> to vector<1x256xf32>
      %423 = vector.broadcast %420 : f32 to vector<1x256xf32>
      %424 = arith.mulf %423, %422 : vector<1x256xf32>
      %425 = arith.addf %419, %424 : vector<1x256xf32>
      %c39 = arith.constant 39 : index
      %426 = memref.load %arg3[%c39] : memref<98xf32, #tpu.memory_space<smem>>
      %c0_209 = arith.constant 0 : index
      %c0_210 = arith.constant 0 : index
      %c161 = arith.constant 161 : index
      %427 = vector.load %arg9[%c0_209, %c0_210, %c161] : memref<2x1x512xf32, #tpu.memory_space<vmem>>, vector<1x1x256xf32>
      %428 = vector.shape_cast %427 : vector<1x1x256xf32> to vector<1x256xf32>
      %429 = vector.broadcast %426 : f32 to vector<1x256xf32>
      %430 = arith.mulf %429, %428 : vector<1x256xf32>
      %431 = arith.addf %425, %430 : vector<1x256xf32>
      %c46 = arith.constant 46 : index
      %432 = memref.load %arg3[%c46] : memref<98xf32, #tpu.memory_space<smem>>
      %c0_211 = arith.constant 0 : index
      %c0_212 = arith.constant 0 : index
      %c177 = arith.constant 177 : index
      %433 = vector.load %arg9[%c0_211, %c0_212, %c177] : memref<2x1x512xf32, #tpu.memory_space<vmem>>, vector<1x1x256xf32>
      %434 = vector.shape_cast %433 : vector<1x1x256xf32> to vector<1x256xf32>
      %435 = vector.broadcast %432 : f32 to vector<1x256xf32>
      %436 = arith.mulf %435, %434 : vector<1x256xf32>
      %437 = arith.addf %431, %436 : vector<1x256xf32>
      %c53 = arith.constant 53 : index
      %438 = memref.load %arg3[%c53] : memref<98xf32, #tpu.memory_space<smem>>
      %c1_213 = arith.constant 1 : index
      %c0_214 = arith.constant 0 : index
      %c81_215 = arith.constant 81 : index
      %439 = vector.load %arg9[%c1_213, %c0_214, %c81_215] : memref<2x1x512xf32, #tpu.memory_space<vmem>>, vector<1x1x256xf32>
      %440 = vector.shape_cast %439 : vector<1x1x256xf32> to vector<1x256xf32>
      %441 = vector.broadcast %438 : f32 to vector<1x256xf32>
      %442 = arith.mulf %441, %440 : vector<1x256xf32>
      %443 = arith.addf %437, %442 : vector<1x256xf32>
      %c60 = arith.constant 60 : index
      %444 = memref.load %arg3[%c60] : memref<98xf32, #tpu.memory_space<smem>>
      %c1_216 = arith.constant 1 : index
      %c0_217 = arith.constant 0 : index
      %c97_218 = arith.constant 97 : index
      %445 = vector.load %arg9[%c1_216, %c0_217, %c97_218] : memref<2x1x512xf32, #tpu.memory_space<vmem>>, vector<1x1x256xf32>
      %446 = vector.shape_cast %445 : vector<1x1x256xf32> to vector<1x256xf32>
      %447 = vector.broadcast %444 : f32 to vector<1x256xf32>
      %448 = arith.mulf %447, %446 : vector<1x256xf32>
      %449 = arith.addf %443, %448 : vector<1x256xf32>
      %c67 = arith.constant 67 : index
      %450 = memref.load %arg3[%c67] : memref<98xf32, #tpu.memory_space<smem>>
      %c1_219 = arith.constant 1 : index
      %c0_220 = arith.constant 0 : index
      %c113_221 = arith.constant 113 : index
      %451 = vector.load %arg9[%c1_219, %c0_220, %c113_221] : memref<2x1x512xf32, #tpu.memory_space<vmem>>, vector<1x1x256xf32>
      %452 = vector.shape_cast %451 : vector<1x1x256xf32> to vector<1x256xf32>
      %453 = vector.broadcast %450 : f32 to vector<1x256xf32>
      %454 = arith.mulf %453, %452 : vector<1x256xf32>
      %455 = arith.addf %449, %454 : vector<1x256xf32>
      %c74 = arith.constant 74 : index
      %456 = memref.load %arg3[%c74] : memref<98xf32, #tpu.memory_space<smem>>
      %c1_222 = arith.constant 1 : index
      %c0_223 = arith.constant 0 : index
      %c129_224 = arith.constant 129 : index
      %457 = vector.load %arg9[%c1_222, %c0_223, %c129_224] : memref<2x1x512xf32, #tpu.memory_space<vmem>>, vector<1x1x256xf32>
      %458 = vector.shape_cast %457 : vector<1x1x256xf32> to vector<1x256xf32>
      %459 = vector.broadcast %456 : f32 to vector<1x256xf32>
      %460 = arith.mulf %459, %458 : vector<1x256xf32>
      %461 = arith.addf %455, %460 : vector<1x256xf32>
      %c81_225 = arith.constant 81 : index
      %462 = memref.load %arg3[%c81_225] : memref<98xf32, #tpu.memory_space<smem>>
      %c1_226 = arith.constant 1 : index
      %c0_227 = arith.constant 0 : index
      %c145_228 = arith.constant 145 : index
      %463 = vector.load %arg9[%c1_226, %c0_227, %c145_228] : memref<2x1x512xf32, #tpu.memory_space<vmem>>, vector<1x1x256xf32>
      %464 = vector.shape_cast %463 : vector<1x1x256xf32> to vector<1x256xf32>
      %465 = vector.broadcast %462 : f32 to vector<1x256xf32>
      %466 = arith.mulf %465, %464 : vector<1x256xf32>
      %467 = arith.addf %461, %466 : vector<1x256xf32>
      %c88 = arith.constant 88 : index
      %468 = memref.load %arg3[%c88] : memref<98xf32, #tpu.memory_space<smem>>
      %c1_229 = arith.constant 1 : index
      %c0_230 = arith.constant 0 : index
      %c161_231 = arith.constant 161 : index
      %469 = vector.load %arg9[%c1_229, %c0_230, %c161_231] : memref<2x1x512xf32, #tpu.memory_space<vmem>>, vector<1x1x256xf32>
      %470 = vector.shape_cast %469 : vector<1x1x256xf32> to vector<1x256xf32>
      %471 = vector.broadcast %468 : f32 to vector<1x256xf32>
      %472 = arith.mulf %471, %470 : vector<1x256xf32>
      %473 = arith.addf %467, %472 : vector<1x256xf32>
      %c95_232 = arith.constant 95 : index
      %474 = memref.load %arg3[%c95_232] : memref<98xf32, #tpu.memory_space<smem>>
      %c1_233 = arith.constant 1 : index
      %c0_234 = arith.constant 0 : index
      %c177_235 = arith.constant 177 : index
      %475 = vector.load %arg9[%c1_233, %c0_234, %c177_235] : memref<2x1x512xf32, #tpu.memory_space<vmem>>, vector<1x1x256xf32>
      %476 = vector.shape_cast %475 : vector<1x1x256xf32> to vector<1x256xf32>
      %477 = vector.broadcast %474 : f32 to vector<1x256xf32>
      %478 = arith.mulf %477, %476 : vector<1x256xf32>
      %479 = arith.addf %473, %478 : vector<1x256xf32>
      %480 = arith.mulf %394, %479 : vector<1x256xf32>
      %481 = arith.addf %392, %480 : vector<1x256xf32>
      %c5 = arith.constant 5 : index
      %c0_236 = arith.constant 0 : index
      %c0_237 = arith.constant 0 : index
      %482 = vector.load %arg5[%c5, %c0_236, %c0_237] : memref<7x1x256xf32, #tpu.memory_space<vmem>>, vector<1x1x256xf32>
      %483 = vector.shape_cast %482 : vector<1x1x256xf32> to vector<1x256xf32>
      %cst_238 = arith.constant 0.000000e+00 : f32
      %484 = vector.broadcast %cst_238 : f32 to vector<1x256xf32>
      %c5_239 = arith.constant 5 : index
      %485 = memref.load %arg3[%c5_239] : memref<98xf32, #tpu.memory_space<smem>>
      %c0_240 = arith.constant 0 : index
      %c0_241 = arith.constant 0 : index
      %c82 = arith.constant 82 : index
      %486 = vector.load %arg9[%c0_240, %c0_241, %c82] : memref<2x1x512xf32, #tpu.memory_space<vmem>>, vector<1x1x256xf32>
      %487 = vector.shape_cast %486 : vector<1x1x256xf32> to vector<1x256xf32>
      %488 = vector.broadcast %485 : f32 to vector<1x256xf32>
      %489 = arith.mulf %488, %487 : vector<1x256xf32>
      %490 = arith.addf %484, %489 : vector<1x256xf32>
      %c12 = arith.constant 12 : index
      %491 = memref.load %arg3[%c12] : memref<98xf32, #tpu.memory_space<smem>>
      %c0_242 = arith.constant 0 : index
      %c0_243 = arith.constant 0 : index
      %c98 = arith.constant 98 : index
      %492 = vector.load %arg9[%c0_242, %c0_243, %c98] : memref<2x1x512xf32, #tpu.memory_space<vmem>>, vector<1x1x256xf32>
      %493 = vector.shape_cast %492 : vector<1x1x256xf32> to vector<1x256xf32>
      %494 = vector.broadcast %491 : f32 to vector<1x256xf32>
      %495 = arith.mulf %494, %493 : vector<1x256xf32>
      %496 = arith.addf %490, %495 : vector<1x256xf32>
      %c19 = arith.constant 19 : index
      %497 = memref.load %arg3[%c19] : memref<98xf32, #tpu.memory_space<smem>>
      %c0_244 = arith.constant 0 : index
      %c0_245 = arith.constant 0 : index
      %c114 = arith.constant 114 : index
      %498 = vector.load %arg9[%c0_244, %c0_245, %c114] : memref<2x1x512xf32, #tpu.memory_space<vmem>>, vector<1x1x256xf32>
      %499 = vector.shape_cast %498 : vector<1x1x256xf32> to vector<1x256xf32>
      %500 = vector.broadcast %497 : f32 to vector<1x256xf32>
      %501 = arith.mulf %500, %499 : vector<1x256xf32>
      %502 = arith.addf %496, %501 : vector<1x256xf32>
      %c26 = arith.constant 26 : index
      %503 = memref.load %arg3[%c26] : memref<98xf32, #tpu.memory_space<smem>>
      %c0_246 = arith.constant 0 : index
      %c0_247 = arith.constant 0 : index
      %c130 = arith.constant 130 : index
      %504 = vector.load %arg9[%c0_246, %c0_247, %c130] : memref<2x1x512xf32, #tpu.memory_space<vmem>>, vector<1x1x256xf32>
      %505 = vector.shape_cast %504 : vector<1x1x256xf32> to vector<1x256xf32>
      %506 = vector.broadcast %503 : f32 to vector<1x256xf32>
      %507 = arith.mulf %506, %505 : vector<1x256xf32>
      %508 = arith.addf %502, %507 : vector<1x256xf32>
      %c33 = arith.constant 33 : index
      %509 = memref.load %arg3[%c33] : memref<98xf32, #tpu.memory_space<smem>>
      %c0_248 = arith.constant 0 : index
      %c0_249 = arith.constant 0 : index
      %c146 = arith.constant 146 : index
      %510 = vector.load %arg9[%c0_248, %c0_249, %c146] : memref<2x1x512xf32, #tpu.memory_space<vmem>>, vector<1x1x256xf32>
      %511 = vector.shape_cast %510 : vector<1x1x256xf32> to vector<1x256xf32>
      %512 = vector.broadcast %509 : f32 to vector<1x256xf32>
      %513 = arith.mulf %512, %511 : vector<1x256xf32>
      %514 = arith.addf %508, %513 : vector<1x256xf32>
      %c40 = arith.constant 40 : index
      %515 = memref.load %arg3[%c40] : memref<98xf32, #tpu.memory_space<smem>>
      %c0_250 = arith.constant 0 : index
      %c0_251 = arith.constant 0 : index
      %c162 = arith.constant 162 : index
      %516 = vector.load %arg9[%c0_250, %c0_251, %c162] : memref<2x1x512xf32, #tpu.memory_space<vmem>>, vector<1x1x256xf32>
      %517 = vector.shape_cast %516 : vector<1x1x256xf32> to vector<1x256xf32>
      %518 = vector.broadcast %515 : f32 to vector<1x256xf32>
      %519 = arith.mulf %518, %517 : vector<1x256xf32>
      %520 = arith.addf %514, %519 : vector<1x256xf32>
      %c47 = arith.constant 47 : index
      %521 = memref.load %arg3[%c47] : memref<98xf32, #tpu.memory_space<smem>>
      %c0_252 = arith.constant 0 : index
      %c0_253 = arith.constant 0 : index
      %c178 = arith.constant 178 : index
      %522 = vector.load %arg9[%c0_252, %c0_253, %c178] : memref<2x1x512xf32, #tpu.memory_space<vmem>>, vector<1x1x256xf32>
      %523 = vector.shape_cast %522 : vector<1x1x256xf32> to vector<1x256xf32>
      %524 = vector.broadcast %521 : f32 to vector<1x256xf32>
      %525 = arith.mulf %524, %523 : vector<1x256xf32>
      %526 = arith.addf %520, %525 : vector<1x256xf32>
      %c54 = arith.constant 54 : index
      %527 = memref.load %arg3[%c54] : memref<98xf32, #tpu.memory_space<smem>>
      %c1_254 = arith.constant 1 : index
      %c0_255 = arith.constant 0 : index
      %c82_256 = arith.constant 82 : index
      %528 = vector.load %arg9[%c1_254, %c0_255, %c82_256] : memref<2x1x512xf32, #tpu.memory_space<vmem>>, vector<1x1x256xf32>
      %529 = vector.shape_cast %528 : vector<1x1x256xf32> to vector<1x256xf32>
      %530 = vector.broadcast %527 : f32 to vector<1x256xf32>
      %531 = arith.mulf %530, %529 : vector<1x256xf32>
      %532 = arith.addf %526, %531 : vector<1x256xf32>
      %c61 = arith.constant 61 : index
      %533 = memref.load %arg3[%c61] : memref<98xf32, #tpu.memory_space<smem>>
      %c1_257 = arith.constant 1 : index
      %c0_258 = arith.constant 0 : index
      %c98_259 = arith.constant 98 : index
      %534 = vector.load %arg9[%c1_257, %c0_258, %c98_259] : memref<2x1x512xf32, #tpu.memory_space<vmem>>, vector<1x1x256xf32>
      %535 = vector.shape_cast %534 : vector<1x1x256xf32> to vector<1x256xf32>
      %536 = vector.broadcast %533 : f32 to vector<1x256xf32>
      %537 = arith.mulf %536, %535 : vector<1x256xf32>
      %538 = arith.addf %532, %537 : vector<1x256xf32>
      %c68 = arith.constant 68 : index
      %539 = memref.load %arg3[%c68] : memref<98xf32, #tpu.memory_space<smem>>
      %c1_260 = arith.constant 1 : index
      %c0_261 = arith.constant 0 : index
      %c114_262 = arith.constant 114 : index
      %540 = vector.load %arg9[%c1_260, %c0_261, %c114_262] : memref<2x1x512xf32, #tpu.memory_space<vmem>>, vector<1x1x256xf32>
      %541 = vector.shape_cast %540 : vector<1x1x256xf32> to vector<1x256xf32>
      %542 = vector.broadcast %539 : f32 to vector<1x256xf32>
      %543 = arith.mulf %542, %541 : vector<1x256xf32>
      %544 = arith.addf %538, %543 : vector<1x256xf32>
      %c75 = arith.constant 75 : index
      %545 = memref.load %arg3[%c75] : memref<98xf32, #tpu.memory_space<smem>>
      %c1_263 = arith.constant 1 : index
      %c0_264 = arith.constant 0 : index
      %c130_265 = arith.constant 130 : index
      %546 = vector.load %arg9[%c1_263, %c0_264, %c130_265] : memref<2x1x512xf32, #tpu.memory_space<vmem>>, vector<1x1x256xf32>
      %547 = vector.shape_cast %546 : vector<1x1x256xf32> to vector<1x256xf32>
      %548 = vector.broadcast %545 : f32 to vector<1x256xf32>
      %549 = arith.mulf %548, %547 : vector<1x256xf32>
      %550 = arith.addf %544, %549 : vector<1x256xf32>
      %c82_266 = arith.constant 82 : index
      %551 = memref.load %arg3[%c82_266] : memref<98xf32, #tpu.memory_space<smem>>
      %c1_267 = arith.constant 1 : index
      %c0_268 = arith.constant 0 : index
      %c146_269 = arith.constant 146 : index
      %552 = vector.load %arg9[%c1_267, %c0_268, %c146_269] : memref<2x1x512xf32, #tpu.memory_space<vmem>>, vector<1x1x256xf32>
      %553 = vector.shape_cast %552 : vector<1x1x256xf32> to vector<1x256xf32>
      %554 = vector.broadcast %551 : f32 to vector<1x256xf32>
      %555 = arith.mulf %554, %553 : vector<1x256xf32>
      %556 = arith.addf %550, %555 : vector<1x256xf32>
      %c89 = arith.constant 89 : index
      %557 = memref.load %arg3[%c89] : memref<98xf32, #tpu.memory_space<smem>>
      %c1_270 = arith.constant 1 : index
      %c0_271 = arith.constant 0 : index
      %c162_272 = arith.constant 162 : index
      %558 = vector.load %arg9[%c1_270, %c0_271, %c162_272] : memref<2x1x512xf32, #tpu.memory_space<vmem>>, vector<1x1x256xf32>
      %559 = vector.shape_cast %558 : vector<1x1x256xf32> to vector<1x256xf32>
      %560 = vector.broadcast %557 : f32 to vector<1x256xf32>
      %561 = arith.mulf %560, %559 : vector<1x256xf32>
      %562 = arith.addf %556, %561 : vector<1x256xf32>
      %c96_273 = arith.constant 96 : index
      %563 = memref.load %arg3[%c96_273] : memref<98xf32, #tpu.memory_space<smem>>
      %c1_274 = arith.constant 1 : index
      %c0_275 = arith.constant 0 : index
      %c178_276 = arith.constant 178 : index
      %564 = vector.load %arg9[%c1_274, %c0_275, %c178_276] : memref<2x1x512xf32, #tpu.memory_space<vmem>>, vector<1x1x256xf32>
      %565 = vector.shape_cast %564 : vector<1x1x256xf32> to vector<1x256xf32>
      %566 = vector.broadcast %563 : f32 to vector<1x256xf32>
      %567 = arith.mulf %566, %565 : vector<1x256xf32>
      %568 = arith.addf %562, %567 : vector<1x256xf32>
      %569 = arith.mulf %483, %568 : vector<1x256xf32>
      %570 = arith.addf %481, %569 : vector<1x256xf32>
      %c6 = arith.constant 6 : index
      %c0_277 = arith.constant 0 : index
      %c0_278 = arith.constant 0 : index
      %571 = vector.load %arg5[%c6, %c0_277, %c0_278] : memref<7x1x256xf32, #tpu.memory_space<vmem>>, vector<1x1x256xf32>
      %572 = vector.shape_cast %571 : vector<1x1x256xf32> to vector<1x256xf32>
      %cst_279 = arith.constant 0.000000e+00 : f32
      %573 = vector.broadcast %cst_279 : f32 to vector<1x256xf32>
      %c6_280 = arith.constant 6 : index
      %574 = memref.load %arg3[%c6_280] : memref<98xf32, #tpu.memory_space<smem>>
      %c0_281 = arith.constant 0 : index
      %c0_282 = arith.constant 0 : index
      %c83 = arith.constant 83 : index
      %575 = vector.load %arg9[%c0_281, %c0_282, %c83] : memref<2x1x512xf32, #tpu.memory_space<vmem>>, vector<1x1x256xf32>
      %576 = vector.shape_cast %575 : vector<1x1x256xf32> to vector<1x256xf32>
      %577 = vector.broadcast %574 : f32 to vector<1x256xf32>
      %578 = arith.mulf %577, %576 : vector<1x256xf32>
      %579 = arith.addf %573, %578 : vector<1x256xf32>
      %c13 = arith.constant 13 : index
      %580 = memref.load %arg3[%c13] : memref<98xf32, #tpu.memory_space<smem>>
      %c0_283 = arith.constant 0 : index
      %c0_284 = arith.constant 0 : index
      %c99 = arith.constant 99 : index
      %581 = vector.load %arg9[%c0_283, %c0_284, %c99] : memref<2x1x512xf32, #tpu.memory_space<vmem>>, vector<1x1x256xf32>
      %582 = vector.shape_cast %581 : vector<1x1x256xf32> to vector<1x256xf32>
      %583 = vector.broadcast %580 : f32 to vector<1x256xf32>
      %584 = arith.mulf %583, %582 : vector<1x256xf32>
      %585 = arith.addf %579, %584 : vector<1x256xf32>
      %c20 = arith.constant 20 : index
      %586 = memref.load %arg3[%c20] : memref<98xf32, #tpu.memory_space<smem>>
      %c0_285 = arith.constant 0 : index
      %c0_286 = arith.constant 0 : index
      %c115 = arith.constant 115 : index
      %587 = vector.load %arg9[%c0_285, %c0_286, %c115] : memref<2x1x512xf32, #tpu.memory_space<vmem>>, vector<1x1x256xf32>
      %588 = vector.shape_cast %587 : vector<1x1x256xf32> to vector<1x256xf32>
      %589 = vector.broadcast %586 : f32 to vector<1x256xf32>
      %590 = arith.mulf %589, %588 : vector<1x256xf32>
      %591 = arith.addf %585, %590 : vector<1x256xf32>
      %c27 = arith.constant 27 : index
      %592 = memref.load %arg3[%c27] : memref<98xf32, #tpu.memory_space<smem>>
      %c0_287 = arith.constant 0 : index
      %c0_288 = arith.constant 0 : index
      %c131 = arith.constant 131 : index
      %593 = vector.load %arg9[%c0_287, %c0_288, %c131] : memref<2x1x512xf32, #tpu.memory_space<vmem>>, vector<1x1x256xf32>
      %594 = vector.shape_cast %593 : vector<1x1x256xf32> to vector<1x256xf32>
      %595 = vector.broadcast %592 : f32 to vector<1x256xf32>
      %596 = arith.mulf %595, %594 : vector<1x256xf32>
      %597 = arith.addf %591, %596 : vector<1x256xf32>
      %c34 = arith.constant 34 : index
      %598 = memref.load %arg3[%c34] : memref<98xf32, #tpu.memory_space<smem>>
      %c0_289 = arith.constant 0 : index
      %c0_290 = arith.constant 0 : index
      %c147 = arith.constant 147 : index
      %599 = vector.load %arg9[%c0_289, %c0_290, %c147] : memref<2x1x512xf32, #tpu.memory_space<vmem>>, vector<1x1x256xf32>
      %600 = vector.shape_cast %599 : vector<1x1x256xf32> to vector<1x256xf32>
      %601 = vector.broadcast %598 : f32 to vector<1x256xf32>
      %602 = arith.mulf %601, %600 : vector<1x256xf32>
      %603 = arith.addf %597, %602 : vector<1x256xf32>
      %c41 = arith.constant 41 : index
      %604 = memref.load %arg3[%c41] : memref<98xf32, #tpu.memory_space<smem>>
      %c0_291 = arith.constant 0 : index
      %c0_292 = arith.constant 0 : index
      %c163 = arith.constant 163 : index
      %605 = vector.load %arg9[%c0_291, %c0_292, %c163] : memref<2x1x512xf32, #tpu.memory_space<vmem>>, vector<1x1x256xf32>
      %606 = vector.shape_cast %605 : vector<1x1x256xf32> to vector<1x256xf32>
      %607 = vector.broadcast %604 : f32 to vector<1x256xf32>
      %608 = arith.mulf %607, %606 : vector<1x256xf32>
      %609 = arith.addf %603, %608 : vector<1x256xf32>
      %c48 = arith.constant 48 : index
      %610 = memref.load %arg3[%c48] : memref<98xf32, #tpu.memory_space<smem>>
      %c0_293 = arith.constant 0 : index
      %c0_294 = arith.constant 0 : index
      %c179 = arith.constant 179 : index
      %611 = vector.load %arg9[%c0_293, %c0_294, %c179] : memref<2x1x512xf32, #tpu.memory_space<vmem>>, vector<1x1x256xf32>
      %612 = vector.shape_cast %611 : vector<1x1x256xf32> to vector<1x256xf32>
      %613 = vector.broadcast %610 : f32 to vector<1x256xf32>
      %614 = arith.mulf %613, %612 : vector<1x256xf32>
      %615 = arith.addf %609, %614 : vector<1x256xf32>
      %c55 = arith.constant 55 : index
      %616 = memref.load %arg3[%c55] : memref<98xf32, #tpu.memory_space<smem>>
      %c1_295 = arith.constant 1 : index
      %c0_296 = arith.constant 0 : index
      %c83_297 = arith.constant 83 : index
      %617 = vector.load %arg9[%c1_295, %c0_296, %c83_297] : memref<2x1x512xf32, #tpu.memory_space<vmem>>, vector<1x1x256xf32>
      %618 = vector.shape_cast %617 : vector<1x1x256xf32> to vector<1x256xf32>
      %619 = vector.broadcast %616 : f32 to vector<1x256xf32>
      %620 = arith.mulf %619, %618 : vector<1x256xf32>
      %621 = arith.addf %615, %620 : vector<1x256xf32>
      %c62 = arith.constant 62 : index
      %622 = memref.load %arg3[%c62] : memref<98xf32, #tpu.memory_space<smem>>
      %c1_298 = arith.constant 1 : index
      %c0_299 = arith.constant 0 : index
      %c99_300 = arith.constant 99 : index
      %623 = vector.load %arg9[%c1_298, %c0_299, %c99_300] : memref<2x1x512xf32, #tpu.memory_space<vmem>>, vector<1x1x256xf32>
      %624 = vector.shape_cast %623 : vector<1x1x256xf32> to vector<1x256xf32>
      %625 = vector.broadcast %622 : f32 to vector<1x256xf32>
      %626 = arith.mulf %625, %624 : vector<1x256xf32>
      %627 = arith.addf %621, %626 : vector<1x256xf32>
      %c69 = arith.constant 69 : index
      %628 = memref.load %arg3[%c69] : memref<98xf32, #tpu.memory_space<smem>>
      %c1_301 = arith.constant 1 : index
      %c0_302 = arith.constant 0 : index
      %c115_303 = arith.constant 115 : index
      %629 = vector.load %arg9[%c1_301, %c0_302, %c115_303] : memref<2x1x512xf32, #tpu.memory_space<vmem>>, vector<1x1x256xf32>
      %630 = vector.shape_cast %629 : vector<1x1x256xf32> to vector<1x256xf32>
      %631 = vector.broadcast %628 : f32 to vector<1x256xf32>
      %632 = arith.mulf %631, %630 : vector<1x256xf32>
      %633 = arith.addf %627, %632 : vector<1x256xf32>
      %c76 = arith.constant 76 : index
      %634 = memref.load %arg3[%c76] : memref<98xf32, #tpu.memory_space<smem>>
      %c1_304 = arith.constant 1 : index
      %c0_305 = arith.constant 0 : index
      %c131_306 = arith.constant 131 : index
      %635 = vector.load %arg9[%c1_304, %c0_305, %c131_306] : memref<2x1x512xf32, #tpu.memory_space<vmem>>, vector<1x1x256xf32>
      %636 = vector.shape_cast %635 : vector<1x1x256xf32> to vector<1x256xf32>
      %637 = vector.broadcast %634 : f32 to vector<1x256xf32>
      %638 = arith.mulf %637, %636 : vector<1x256xf32>
      %639 = arith.addf %633, %638 : vector<1x256xf32>
      %c83_307 = arith.constant 83 : index
      %640 = memref.load %arg3[%c83_307] : memref<98xf32, #tpu.memory_space<smem>>
      %c1_308 = arith.constant 1 : index
      %c0_309 = arith.constant 0 : index
      %c147_310 = arith.constant 147 : index
      %641 = vector.load %arg9[%c1_308, %c0_309, %c147_310] : memref<2x1x512xf32, #tpu.memory_space<vmem>>, vector<1x1x256xf32>
      %642 = vector.shape_cast %641 : vector<1x1x256xf32> to vector<1x256xf32>
      %643 = vector.broadcast %640 : f32 to vector<1x256xf32>
      %644 = arith.mulf %643, %642 : vector<1x256xf32>
      %645 = arith.addf %639, %644 : vector<1x256xf32>
      %c90 = arith.constant 90 : index
      %646 = memref.load %arg3[%c90] : memref<98xf32, #tpu.memory_space<smem>>
      %c1_311 = arith.constant 1 : index
      %c0_312 = arith.constant 0 : index
      %c163_313 = arith.constant 163 : index
      %647 = vector.load %arg9[%c1_311, %c0_312, %c163_313] : memref<2x1x512xf32, #tpu.memory_space<vmem>>, vector<1x1x256xf32>
      %648 = vector.shape_cast %647 : vector<1x1x256xf32> to vector<1x256xf32>
      %649 = vector.broadcast %646 : f32 to vector<1x256xf32>
      %650 = arith.mulf %649, %648 : vector<1x256xf32>
      %651 = arith.addf %645, %650 : vector<1x256xf32>
      %c97_314 = arith.constant 97 : index
      %652 = memref.load %arg3[%c97_314] : memref<98xf32, #tpu.memory_space<smem>>
      %c1_315 = arith.constant 1 : index
      %c0_316 = arith.constant 0 : index
      %c179_317 = arith.constant 179 : index
      %653 = vector.load %arg9[%c1_315, %c0_316, %c179_317] : memref<2x1x512xf32, #tpu.memory_space<vmem>>, vector<1x1x256xf32>
      %654 = vector.shape_cast %653 : vector<1x1x256xf32> to vector<1x256xf32>
      %655 = vector.broadcast %652 : f32 to vector<1x256xf32>
      %656 = arith.mulf %655, %654 : vector<1x256xf32>
      %657 = arith.addf %651, %656 : vector<1x256xf32>
      %658 = arith.mulf %572, %657 : vector<1x256xf32>
      %659 = arith.addf %570, %658 : vector<1x256xf32>
      %660 = arith.negf %659 : vector<1x256xf32>
      %661 = math.exp %660 : vector<1x256xf32>
      %cst_318 = arith.constant 1.000000e+00 : f32
      %662 = vector.broadcast %cst_318 : f32 to vector<1x256xf32>
      %663 = arith.addf %662, %661 : vector<1x256xf32>
      %664 = arith.divf %662, %663 : vector<1x256xf32>
      %c0_319 = arith.constant 0 : index
      %c0_320 = arith.constant 0 : index
      %c0_321 = arith.constant 0 : index
      %665 = vector.load %arg6[%c0_319, %c0_320, %c0_321] : memref<1x1x256xf32, #tpu.memory_space<vmem>>, vector<1x1x256xf32>
      %666 = vector.shape_cast %665 : vector<1x1x256xf32> to vector<1x256xf32>
      %667 = vector.shape_cast %664 : vector<1x256xf32> to vector<1x1x256xf32>
      tpu.vector_store %arg6[%c0_319, %c0_320, %c0_321], %667 {strides = array<i32>} : memref<1x1x256xf32, #tpu.memory_space<vmem>>, vector<1x1x256xf32>,
    } else {
    }
    return
  }
  func.func @transform_0(%arg0: i32, %arg1: i32) -> (i32, i32, i32) {
    %c0_i32 = arith.constant 0 : i32
    %c0_i32_0 = arith.constant 0 : i32
    return %arg0, %arg1, %c0_i32 : i32, i32, i32
  }
  func.func @transform_1(%arg0: i32, %arg1: i32) -> i32 {
    %c0_i32 = arith.constant 0 : i32
    %c0_i32_0 = arith.constant 0 : i32
    return %c0_i32 : i32
  }
  func.func @transform_2(%arg0: i32, %arg1: i32) -> i32 {
    %c0_i32 = arith.constant 0 : i32
    %c0_i32_0 = arith.constant 0 : i32
    return %c0_i32 : i32
  }
  func.func @transform_3(%arg0: i32, %arg1: i32) -> (i32, i32, i32) {
    %c0_i32 = arith.constant 0 : i32
    %c0_i32_0 = arith.constant 0 : i32
    %c0_i32_1 = arith.constant 0 : i32
    %c0_i32_2 = arith.constant 0 : i32
    return %c0_i32, %c0_i32_0, %c0_i32_1 : i32, i32, i32
  }
  func.func @transform_4(%arg0: i32, %arg1: i32) -> (i32, i32, i32) {
    %c0_i32 = arith.constant 0 : i32
    %c0_i32_0 = arith.constant 0 : i32
    %c0_i32_1 = arith.constant 0 : i32
    return %arg0, %c0_i32, %c0_i32_0 : i32, i32, i32
  }
}

</mosaic_0001>

<llo_original>
// kernel: spatial_attention.1
$region0: #{spatial_attention.1}
  #allocation0 [shape = 'u32[]', space=smem, size = 0x4, offset = 0x4, fixed_abs, tag = 'smem constant byte address 0x4 - core index']
  #allocation1 [shape = 'u32[144,128]{1,0:T(1,128)}', space=vmem, size = 0x12000, scoped, tag = 'internal scratch']
  #allocation2 [shape = 'f32[1,256]{1,0:T(1,128)}', space=vmem, size = 0x400, scoped, tag = 'scratch operand']
  #allocation3 [shape = 'f32[1,256]{1,0:T(1,128)}', space=vmem, size = 0x400, scoped, tag = 'scratch operand']
  #allocation4 [shape = 'f32[2,1,512]{2,1,0:T(1,128)}', space=vmem, size = 0x1000, scoped, tag = 'scratch operand']
  #allocation5 [shape = 'f32[1]{0:T(128)S(6)}', space=smem, size = 0x200, scoped, tag = 'scoped memory for spatial_attention.1']
  %s0 = inlined_call_operand.vmem [shape: f32[2,4,256], index: 0, kind: input, shape index: {}]
  %s1 = inlined_call_operand.vmem [shape: f32[98], index: 1, kind: input, shape index: {}]
  %s2 = inlined_call_operand.<no memory space> [shape: f32[1], index: 2, kind: input, shape index: {}]
  %s3 = inlined_call_operand.vmem [shape: f32[7,1,256], index: 3, kind: input, shape index: {}]
  %s4 = inlined_call_operand.vmem [shape: f32[2,1,256], index: 4, kind: output, shape index: {}]
  %s5 = sld [smem:[#allocation0]]
  $region65: #{spatial_attention.1} parent=0
    _
  %s7 = ssub.s32 1, %s5
  %s8 = scalar_select 0, %s7, %s5
  %9 = sst [smem:[#allocation5]] %s2
  $region1: #{spatial_attention.1} parent=0
    #allocation6 [shape = 'u8[512]{0}', space=smem, size = 0x200, scoped, tag = 'input window, operand 1, single buffered']
    #allocation7 [shape = 's32[2]{0}', space=sflag, size = 0x8, scoped, tag = 'scoped memory for spatial_attention.1']
    %10 = vsyncpa [#allocation7], 0
    loop: start=0, step=1, limit=4
    $region2: #{spatial_attention.1} parent=1 // loop_pre_header
      _
    $region3: #{spatial_attention.1} parent=1 // loop_header
      %s12 = sphi 0, %s16
      %p13 = scmp.ge.s32.totalorder %s12, 4
      %s19 = sphi 0, %s31
      %s20 = sphi 0, %s27
      %s21 = sphi 0, %s19
      %s22 = sphi 0, %s20
      %s23 = sphi 0, %s21
      %s24 = sphi 0, %s22
      %s36 = sphi 0, %s38
      %s39 = sphi 0, %s36
      %s40 = sphi 0, %s39
      %s56 = sphi 0, %s40
      %s60 = sphi 0, %s60
      %s62 = sphi 0, %s60
      %s63 = sphi 0, %s62
      %s77 = sphi 0, %s63
      %s81 = sphi 0, %s81
      %s83 = sphi 0, %s81
      %s84 = sphi 0, %s83
      %s98 = sphi 0, %s84
      %s102 = sphi 0, %s102
      %s104 = sphi 0, %s102
      %s105 = sphi 0, %s104
      %s119 = sphi 0, %s105
      %s125 = sphi 0, %s127
      %s128 = sphi 0, %s125
      %s129 = sphi 0, %s128
      %s145 = sphi 0, %s129
    $region4: #{spatial_attention.1} parent=1 // loop_header_branch
      %15 = sbr.rel (%p13) target = $region8
    $region5: #{spatial_attention.1} parent=1 // loop_body
      %s17 = ssub.s32 %s12, 1
      %s18 = ssub.s32 %s12, 2
      %s25 = sadd.s32 1, %s20
      %p26 = scmp.ge.s32.totalorder %s25, 1
      %s27 = scalar_select %p26, 0, %s25
      %s28 = sadd.s32 1, %s19
      %s29 = scalar_select %p26, %s28, %s19
      %p30 = scmp.ge.s32.totalorder %s29, 2
      %s31 = scalar_select %p30, 0, %s29
      %s32 = ssub.s32 %s19, %s31
      %s33 = ssub.s32 %s20, %s27
      %s34 = sor.u32 %s32, %s33
      %p35 = scmp.eq.s32.totalorder %s34, 0
      %s37 = sadd.s32 %s36, 1
      %s38 = scalar_select %p35, %s36, %s37
      %p41 = pneg %p35
      %p42 = scmp.eq.s32.totalorder %s12, 1
      %p43 = por %p41, %p42
      %p44 = scmp.ne.s32.totalorder %s36, %s39
      %p45 = scmp.eq.s32.totalorder %s12, 0
      %p46 = por %p44, %p45
      %p47 = scmp.ne.s32.totalorder %s36, %s39
      %p48 = scmp.eq.s32.totalorder %s17, 1
      %p49 = por %p47, %p48
      %p50 = scmp.ne.s32.totalorder %s39, %s40
      %p51 = scmp.eq.s32.totalorder %s17, 0
      %p52 = por %p50, %p51
      %p53 = scmp.ne.s32.totalorder %s39, %s40
      %p54 = scmp.eq.s32.totalorder %s18, 1
      %p55 = por %p53, %p54
      %p57 = scmp.ne.s32.totalorder %s40, %s56
      %p58 = scmp.eq.s32.totalorder %s18, 0
      %p59 = por %p57, %p58
      %s61 = sadd.s32 %s60, 1
      %p64 = scmp.eq.s32.totalorder %s12, 1
      %p65 = scmp.ne.s32.totalorder %s60, %s62
      %p66 = scmp.eq.s32.totalorder %s12, 0
      %p67 = por %p65, %p66
      %p68 = scmp.ne.s32.totalorder %s60, %s62
      %p69 = scmp.eq.s32.totalorder %s17, 1
      %p70 = por %p68, %p69
      %p71 = scmp.ne.s32.totalorder %s62, %s63
      %p72 = scmp.eq.s32.totalorder %s17, 0
      %p73 = por %p71, %p72
      %p74 = scmp.ne.s32.totalorder %s62, %s63
      %p75 = scmp.eq.s32.totalorder %s18, 1
      %p76 = por %p74, %p75
      %p78 = scmp.ne.s32.totalorder %s63, %s77
      %p79 = scmp.eq.s32.totalorder %s18, 0
      %p80 = por %p78, %p79
      %s82 = sadd.s32 %s81, 1
      %p85 = scmp.eq.s32.totalorder %s12, 1
      %p86 = scmp.ne.s32.totalorder %s81, %s83
      %p87 = scmp.eq.s32.totalorder %s12, 0
      %p88 = por %p86, %p87
      %p89 = scmp.ne.s32.totalorder %s81, %s83
      %p90 = scmp.eq.s32.totalorder %s17, 1
      %p91 = por %p89, %p90
      %p92 = scmp.ne.s32.totalorder %s83, %s84
      %p93 = scmp.eq.s32.totalorder %s17, 0
      %p94 = por %p92, %p93
      %p95 = scmp.ne.s32.totalorder %s83, %s84
      %p96 = scmp.eq.s32.totalorder %s18, 1
      %p97 = por %p95, %p96
      %p99 = scmp.ne.s32.totalorder %s84, %s98
      %p100 = scmp.eq.s32.totalorder %s18, 0
      %p101 = por %p99, %p100
      %s103 = sadd.s32 %s102, 1
      %p106 = scmp.eq.s32.totalorder %s12, 1
      %p107 = scmp.ne.s32.totalorder %s102, %s104
      %p108 = scmp.eq.s32.totalorder %s12, 0
      %p109 = por %p107, %p108
      %p110 = scmp.ne.s32.totalorder %s102, %s104
      %p111 = scmp.eq.s32.totalorder %s17, 1
      %p112 = por %p110, %p111
      %p113 = scmp.ne.s32.totalorder %s104, %s105
      %p114 = scmp.eq.s32.totalorder %s17, 0
      %p115 = por %p113, %p114
      %p116 = scmp.ne.s32.totalorder %s104, %s105
      %p117 = scmp.eq.s32.totalorder %s18, 1
      %p118 = por %p116, %p117
      %p120 = scmp.ne.s32.totalorder %s105, %s119
      %p121 = scmp.eq.s32.totalorder %s18, 0
      %p122 = por %p120, %p121
      %s123 = ssub.s32 %s19, %s31
      %p124 = scmp.eq.s32.totalorder %s123, 0
      %s126 = sadd.s32 %s125, 1
      %s127 = scalar_select %p124, %s125, %s126
      %p130 = pneg %p124
      %p131 = scmp.eq.s32.totalorder %s12, 1
      %p132 = por %p130, %p131
      %p133 = scmp.ne.s32.totalorder %s125, %s128
      %p134 = scmp.eq.s32.totalorder %s12, 0
      %p135 = por %p133, %p134
      %p136 = scmp.ne.s32.totalorder %s125, %s128
      %p137 = scmp.eq.s32.totalorder %s17, 1
      %p138 = por %p136, %p137
      %p139 = scmp.ne.s32.totalorder %s128, %s129
      %p140 = scmp.eq.s32.totalorder %s17, 0
      %p141 = por %p139, %p140
      %p142 = scmp.ne.s32.totalorder %s128, %s129
      %p143 = scmp.eq.s32.totalorder %s18, 1
      %p144 = por %p142, %p143
      %p146 = scmp.ne.s32.totalorder %s129, %s145
      %p147 = scmp.eq.s32.totalorder %s18, 0
      %p148 = por %p146, %p147
      %p149 = scmp.le.s32.totalorder 1, %s12
      %p150 = scmp.lt.s32.totalorder %s12, 3
      %p151 = pnand %p149, %p150
      %p152 = pneg %p151
      // Predicated region
      $region9: #{spatial_attention.1} parent=5 // pred_check
        _
      $region10: #{spatial_attention.1} parent=5 // pred_check_branch
        %154 = sbr.rel (%p151) target = $region12
      $region11: #{spatial_attention.1} parent=5 // pred_region
        %s155 = ssub.s32 %s12, 1
        // Predicated region
        $region13: #{spatial_attention.1} parent=11 // pred_check
          %p156 = pneg %p73
        $region14: #{spatial_attention.1} parent=11 // pred_check_branch
          %158 = sbr.rel (%p156) target = $region16
        $region15: #{spatial_attention.1} parent=11 // pred_region
          %s160 = ssub.s32 16, 16
          %161 = vsyncadd [#allocation7], %s160
          %s163 = sshll.u32 %s1, 4
          %s164 = int_to_ptr.vmem [resolvable:$true] %s163
          %166 = dma.vmem_to_smem %s164, 16, [#allocation6], [#allocation7]
        $region16: #{spatial_attention.1} parent=11 // pred_fallthru
          _
        // Predicated region
        $region17: #{spatial_attention.1} parent=11 // pred_check
          %p167 = pneg %p94
        $region18: #{spatial_attention.1} parent=11 // pred_check_branch
          %169 = sbr.rel (%p167) target = $region20
        $region19: #{spatial_attention.1} parent=11 // pred_region
          _
        $region20: #{spatial_attention.1} parent=11 // pred_fallthru
          _
        // Predicated region
        $region21: #{spatial_attention.1} parent=11 // pred_check
          %p170 = pneg %p115
        $region22: #{spatial_attention.1} parent=11 // pred_check_branch
          %172 = sbr.rel (%p170) target = $region24
        $region23: #{spatial_attention.1} parent=11 // pred_region
          _
        $region24: #{spatial_attention.1} parent=11 // pred_fallthru
          _
      $region12: #{spatial_attention.1} parent=5 // pred_fallthru
        _
      %p173 = scmp.lt.s32.totalorder %s12, 2
      // Predicated region
      $region25: #{spatial_attention.1} parent=5 // pred_check
        %p174 = pneg %p173
      $region26: #{spatial_attention.1} parent=5 // pred_check_branch
        %176 = sbr.rel (%p174) target = $region28
      $region27: #{spatial_attention.1} parent=5 // pred_region
        // Predicated region
        $region29: #{spatial_attention.1} parent=27 // pred_check
          %p177 = pneg %p46
        $region30: #{spatial_attention.1} parent=27 // pred_check_branch
          %179 = sbr.rel (%p177) target = $region32
        $region31: #{spatial_attention.1} parent=27 // pred_region
          %p180 = scmp.lt.s32.totalorder %s19, 1
          %s181 = scalar_select %p180, %s19, 1
          %p182 = scmp.lt.s32.totalorder %s20, 0
          %s183 = scalar_select %p182, %s20, 0
          %s184 = smul.addr %s183, 2
          %s185 = smul.addr %s181, 2
          %s186 = sadd.s32 %s184, %s185
          %s187 = smul.addr %s186, 4
          %s188 = scalar_lea.vmem %s0, %s187
        $region32: #{spatial_attention.1} parent=27 // pred_fallthru
          _
      $region28: #{spatial_attention.1} parent=5 // pred_fallthru
        _
      %p189 = scmp.le.s32.totalorder 1, %s12
      %p190 = scmp.lt.s32.totalorder %s12, 3
      %p191 = pnand %p189, %p190
      %p192 = pneg %p191
      // Predicated region
      $region33: #{spatial_attention.1} parent=5 // pred_check
        _
      $region34: #{spatial_attention.1} parent=5 // pred_check_branch
        %194 = sbr.rel (%p191) target = $region36
      $region35: #{spatial_attention.1} parent=5 // pred_region
        %s195 = ssub.s32 %s12, 1
        // Predicated region
        $region37: #{spatial_attention.1} parent=35 // pred_check
          %p196 = pneg %p73
        $region38: #{spatial_attention.1} parent=35 // pred_check_branch
          %198 = sbr.rel (%p196) target = $region40
        $region39: #{spatial_attention.1} parent=35 // pred_region
          %199 = dma.done [#allocation7], 16
        $region40: #{spatial_attention.1} parent=35 // pred_fallthru
          _
        %200 = sfence
        %p201 = scmp.lt.s32.totalorder %s21, 1
        %s202 = scalar_select %p201, %s21, 1
        %p203 = scmp.lt.s32.totalorder %s22, 0
        %s204 = scalar_select %p203, %s22, 0
        %s205 = smul.addr %s204, 2
        %s206 = smul.addr %s202, 2
        %s207 = sadd.s32 %s205, %s206
        %s208 = smul.addr %s207, 4
        %s209 = scalar_lea.vmem %s0, %s208
        %p210 = pneg %p52
        %p211 = pneg %p49
        %p212 = pneg %p73
        %p213 = pneg %p70
        %p214 = pneg %p94
        %p215 = pneg %p91
        %p216 = pneg %p115
        %p217 = pneg %p112
        %p218 = pneg %p141
        %p219 = pneg %p138
        %p220 = scmp.lt.s32.totalorder %s21, 1
        %s221 = scalar_select %p220, %s21, 1
        %s222 = smul.addr %s221, 2
        %s223 = scalar_lea.vmem %s4, %s222
        %p224 = scmp.lt.s32.totalorder %s21, 1
        %s225 = scalar_select %p224, %s21, 1
        %p226 = scmp.lt.s32.totalorder %s22, 0
        %s227 = scalar_select %p226, %s22, 0
        %s228 = smul.addr %s227, 2
        %s229 = smul.addr %s225, 2
        %s230 = sadd.s32 %s228, %s229
        %s231 = smul.addr %s230, 4
        %s232 = scalar_lea.vmem %s0, %s231
        %p233 = scmp.lt.s32.totalorder %s21, 1
        %s234 = scalar_select %p233, %s21, 1
        %s235 = smul.addr %s234, 2
        %s236 = scalar_lea.vmem %s4, %s235
        %v237 = vld [vmem:[%s232] sm:$0xff]
        %v239 = vcombine.high %v237, %v237
        %vm241 = vcmask 1043456
        %v242 = vsel %vm241, %v237, 0.0
        %v243 = vrot.slane %v242, 4
        %v244 = vadd.f32 %v242, %v243
        %v245 = vrot.slane %v244, 2
        %v246 = vadd.f32 %v244, %v245
        %v247 = vrot.slane %v246, 1
        %v248 = vadd.f32 %v246, %v247
        %v249 = vsel %vm241, %v239, 0.0
        %v250 = vrot.slane %v249, 4
        %v251 = vadd.f32 %v249, %v250
        %v252 = vrot.slane %v251, 2
        %v253 = vadd.f32 %v251, %v252
        %v254 = vrot.slane %v253, 1
        %v255 = vadd.f32 %v253, %v254
        %v256 = vsel %vm241, %v237, -inf
        %v257 = vrot.slane %v256, 4
        %v258 = vmax.f32 %v256, %v257
        %v259 = vrot.slane %v258, 2
        %v260 = vmax.f32 %v258, %v259
        %v261 = vrot.slane %v260, 1
        %v262 = vmax.f32 %v260, %v261
        %v263 = vsel %vm241, %v239, -inf
        %v264 = vrot.slane %v263, 4
        %v265 = vmax.f32 %v263, %v264
        %v266 = vrot.slane %v265, 2
        %v267 = vmax.f32 %v265, %v266
        %v268 = vrot.slane %v267, 1
        %v269 = vmax.f32 %v267, %v268
        %p270 = scmp.eq.s32.totalorder %s22, 0
        // Predicated region
        $region41: #{spatial_attention.1} parent=35 // pred_check
          %p271 = pneg %p270
        $region42: #{spatial_attention.1} parent=35 // pred_check_branch
          %273 = sbr.rel (%p271) target = $region44
        $region43: #{spatial_attention.1} parent=35 // pred_region
          %v276 = vcombine.low %v248, %v255
          %v278 = vunpack.c.l.s4 1966171168
          %v279 = vunpack.c.0.s8 %v278
          %v280 = vlaneseq
          %v281 = vshrl.u32 %v280, 7
          %v282 = vsub.s32 %v279, %v281
          %v283 = vrot.slane %v276, %v282
          %v285 = vunpack.c.l.s4 1966171168
          %v286 = vunpack.c.0.s8 %v285
          %v287 = vlaneseq
          %v288 = vshrl.u32 %v287, 7
          %v289 = vsub.s32 %v286, %v288
          %v290 = vrot.slane %v283, %v289
          %v292 = vlaneseq
          %vm293 = vcmp.ge.s32.totalorder %v292, 0
          %vm294 = vcmp.lt.s32.totalorder %v292, 256
          %vm295 = vmand %vm293, %vm294
          %296 = vst.msk [vmem:[#allocation2] sm:$0x3] %vm295, %v290
          %v299 = vcombine.low %v262, %v269
          %v301 = vunpack.c.l.s4 1966171168
          %v302 = vunpack.c.0.s8 %v301
          %v303 = vlaneseq
          %v304 = vshrl.u32 %v303, 7
          %v305 = vsub.s32 %v302, %v304
          %v306 = vrot.slane %v299, %v305
          %v308 = vunpack.c.l.s4 1966171168
          %v309 = vunpack.c.0.s8 %v308
          %v310 = vlaneseq
          %v311 = vshrl.u32 %v310, 7
          %v312 = vsub.s32 %v309, %v311
          %v313 = vrot.slane %v306, %v312
          %315 = vst.msk [vmem:[#allocation3] sm:$0x3] %vm295, %v313
        $region44: #{spatial_attention.1} parent=35 // pred_fallthru
          _
        %p316 = scmp.gt.s32.totalorder %s22, 0
        // Predicated region
        $region45: #{spatial_attention.1} parent=35 // pred_check
          %p317 = pneg %p316
        $region46: #{spatial_attention.1} parent=35 // pred_check_branch
          %319 = sbr.rel (%p317) target = $region48
        $region47: #{spatial_attention.1} parent=35 // pred_region
          %v320 = vld [vmem:[#allocation2] sm:$0x3]
          %v323 = vcombine.low %v248, %v255
          %v325 = vunpack.c.l.s4 1966171168
          %v326 = vunpack.c.0.s8 %v325
          %v327 = vlaneseq
          %v328 = vshrl.u32 %v327, 7
          %v329 = vsub.s32 %v326, %v328
          %v330 = vrot.slane %v323, %v329
          %v332 = vunpack.c.l.s4 1966171168
          %v333 = vunpack.c.0.s8 %v332
          %v334 = vlaneseq
          %v335 = vshrl.u32 %v334, 7
          %v336 = vsub.s32 %v333, %v335
          %v337 = vrot.slane %v330, %v336
          %v339 = vadd.f32 %v320, %v337
          %v340 = vlaneseq
          %vm341 = vcmp.ge.s32.totalorder %v340, 0
          %vm342 = vcmp.lt.s32.totalorder %v340, 256
          %vm343 = vmand %vm341, %vm342
          %344 = vst.msk [vmem:[#allocation2] sm:$0x3] %vm343, %v339
          %v345 = vld [vmem:[#allocation3] sm:$0x3]
          %v348 = vcombine.low %v262, %v269
          %v350 = vunpack.c.l.s4 1966171168
          %v351 = vunpack.c.0.s8 %v350
          %v352 = vlaneseq
          %v353 = vshrl.u32 %v352, 7
          %v354 = vsub.s32 %v351, %v353
          %v355 = vrot.slane %v348, %v354
          %v357 = vunpack.c.l.s4 1966171168
          %v358 = vunpack.c.0.s8 %v357
          %v359 = vlaneseq
          %v360 = vshrl.u32 %v359, 7
          %v361 = vsub.s32 %v358, %v360
          %v362 = vrot.slane %v355, %v361
          %v364 = vmax.f32 %v345, %v362
          %365 = vst.msk [vmem:[#allocation3] sm:$0x3] %vm343, %v364
        $region48: #{spatial_attention.1} parent=35 // pred_fallthru
          _
        // Predicated region
        $region49: #{spatial_attention.1} parent=35 // pred_check
          %p366 = pneg %p270
        $region50: #{spatial_attention.1} parent=35 // pred_check_branch
          %368 = sbr.rel (%p366) target = $region52
        $region51: #{spatial_attention.1} parent=35 // pred_region
          %v369 = vlaneseq
          %vm370 = vcmp.ge.s32.totalorder %v369, 0
          %vm371 = vcmp.lt.s32.totalorder %v369, 128
          %vm372 = vmand %vm370, %vm371
          %373 = vst.msk [vmem:[#allocation4] sm:$0x1] %vm372, 0.0
          %374 = vst.msk [vmem:[#allocation4 + $0x3] sm:$0x1] %vm372, 0.0
          %s375 = scalar_lea.vmem [#allocation4], 4
          %376 = vst.msk [vmem:[%s375] sm:$0x1] %vm372, 0.0
          %377 = vst.msk [vmem:[%s375 + $0x3] sm:$0x1] %vm372, 0.0
          %v378 = vld [vmem:[#allocation2] sm:$0x3]
          %v379 = vmul.f32 %v378, 0.25
          %vm380 = vcmp.lt.s32.totalorder %v369, 256
          %vm381 = vmand %vm370, %vm380
          %382 = vst.msk [vmem:[#allocation4 + $0x1] sm:$0x3] %vm381, %v379
          %v383 = vld [vmem:[#allocation3] sm:$0x3]
          %384 = vst.msk [vmem:[%s375 + $0x1] sm:$0x3] %vm381, %v383
          %s385 = sld [smem:[#allocation5]]
          %v386 = vstv %s385
          %v387 = vld [vmem:[%s3] sm:$0x3]
          %s388 = sld [smem:[#allocation6]]
          %v389 = vld [vmem:[#allocation4] sm:$0x7]
          %v390 = vstv %s388
          %v391 = vmul.f32 %v390, %v389
          %v392 = vadd.f32 %v391, 0.0
          %s393 = sld [smem:[#allocation6 + $0x7]]
          %v394 = vstv %s393
          %v395 = vmul.f32 %v394, %v389
          %397 = vrot.lane.b32.xlu0 %v395, 112
          %v398 = vpop.permute.xlu0 %397
          %v399 = vrot.slane %v398, 1
          %vm400 = vcmask 916480
          %v401 = vsel %vm400, %v398, %v399
          %v403 = vadd.f32 %v392, %v401
          %s404 = sld [smem:[#allocation6 + $0xe]]
          %v405 = vstv %s404
          %v406 = vmul.f32 %v405, %v389
          %408 = vrot.lane.b32.xlu0 %v406, 96
          %v409 = vpop.permute.xlu0 %408
          %v410 = vrot.slane %v409, 1
          %vm411 = vcmask 785408
          %v412 = vsel %vm411, %v409, %v410
          %v414 = vadd.f32 %v403, %v412
          %s415 = sld [smem:[#allocation6 + $0x15]]
          %v416 = vstv %s415
          %v417 = vmul.f32 %v416, %v389
          %419 = vrot.lane.b32.xlu0 %v417, 80
          %v420 = vpop.permute.xlu0 %419
          %v421 = vrot.slane %v420, 1
          %vm422 = vcmask 654336
          %v423 = vsel %vm422, %v420, %v421
          %v425 = vadd.f32 %v414, %v423
          %s426 = sld [smem:[#allocation6 + $0x1c]]
          %v427 = vld [vmem:[#allocation4 + $0x1] sm:$0x7]
          %v428 = vstv %s426
          %v429 = vmul.f32 %v428, %v427
          %431 = vrot.lane.b32.xlu0 %v429, 64
          %v432 = vpop.permute.xlu0 %431
          %v433 = vrot.slane %v432, 7
          %vm434 = vcmask 523264
          %v435 = vsel %vm434, %v433, %v432
          %v437 = vadd.f32 %v425, %v435
          %s438 = sld [smem:[#allocation6 + $0x23]]
          %v439 = vstv %s438
          %v440 = vmul.f32 %v439, %v427
          %442 = vrot.lane.b32.xlu0 %v440, 48
          %v443 = vpop.permute.xlu0 %442
          %v444 = vrot.slane %v443, 7
          %vm445 = vcmask 392192
          %v446 = vsel %vm445, %v444, %v443
          %v448 = vadd.f32 %v437, %v446
          %s449 = sld [smem:[#allocation6 + $0x2a]]
          %v450 = vstv %s449
          %v451 = vmul.f32 %v450, %v427
          %453 = vrot.lane.b32.xlu0 %v451, 32
          %v454 = vpop.permute.xlu0 %453
          %v455 = vrot.slane %v454, 7
          %vm456 = vcmask 261120
          %v457 = vsel %vm456, %v455, %v454
          %v459 = vadd.f32 %v448, %v457
          %s460 = sld [smem:[#allocation6 + $0x31]]
          %v461 = vld [vmem:[%s375] sm:$0x7]
          %v462 = vstv %s460
          %v463 = vmul.f32 %v462, %v461
          %v464 = vadd.f32 %v459, %v463
          %s465 = sld [smem:[#allocation6 + $0x38]]
          %v466 = vstv %s465
          %v467 = vmul.f32 %v466, %v461
          %469 = vrot.lane.b32.xlu0 %v467, 112
          %v470 = vpop.permute.xlu0 %469
          %v471 = vrot.slane %v470, 1
          %v472 = vsel %vm400, %v470, %v471
          %v474 = vadd.f32 %v464, %v472
          %s475 = sld [smem:[#allocation6 + $0x3f]]
          %v476 = vstv %s475
          %v477 = vmul.f32 %v476, %v461
          %479 = vrot.lane.b32.xlu0 %v477, 96
          %v480 = vpop.permute.xlu0 %479
          %v481 = vrot.slane %v480, 1
          %v482 = vsel %vm411, %v480, %v481
          %v484 = vadd.f32 %v474, %v482
          %s485 = sld [smem:[#allocation6 + $0x46]]
          %v486 = vstv %s485
          %v487 = vmul.f32 %v486, %v461
          %489 = vrot.lane.b32.xlu0 %v487, 80
          %v490 = vpop.permute.xlu0 %489
          %v491 = vrot.slane %v490, 1
          %v492 = vsel %vm422, %v490, %v491
          %v494 = vadd.f32 %v484, %v492
          %s495 = sld [smem:[#allocation6 + $0x4d]]
          %v496 = vld [vmem:[%s375 + $0x1] sm:$0x7]
          %v497 = vstv %s495
          %v498 = vmul.f32 %v497, %v496
          %500 = vrot.lane.b32.xlu0 %v498, 64
          %v501 = vpop.permute.xlu0 %500
          %v502 = vrot.slane %v501, 7
          %v503 = vsel %vm434, %v502, %v501
          %v505 = vadd.f32 %v494, %v503
          %s506 = sld [smem:[#allocation6 + $0x54]]
          %v507 = vstv %s506
          %v508 = vmul.f32 %v507, %v496
          %510 = vrot.lane.b32.xlu0 %v508, 48
          %v511 = vpop.permute.xlu0 %510
          %v512 = vrot.slane %v511, 7
          %v513 = vsel %vm445, %v512, %v511
          %v515 = vadd.f32 %v505, %v513
          %s516 = sld [smem:[#allocation6 + $0x5b]]
          %v517 = vstv %s516
          %v518 = vmul.f32 %v517, %v496
          %520 = vrot.lane.b32.xlu0 %v518, 32
          %v521 = vpop.permute.xlu0 %520
          %v522 = vrot.slane %v521, 7
          %v523 = vsel %vm456, %v522, %v521
          %v525 = vadd.f32 %v515, %v523
          %527 = vrot.lane.b32.xlu0 %v525, 51
          %v528 = vpop.permute.xlu0 %527
          %v529 = vrot.slane %v528, 1
          %vm530 = vcmask 416768
          %v531 = vsel %vm530, %v528, %v529
          %v533 = vmul.f32 %v387, %v531
          %v534 = vadd.f32 %v386, %v533
          %s535 = scalar_lea.vmem %s3, 2
          %v536 = vld [vmem:[%s535] sm:$0x3]
          %s537 = sld [smem:[#allocation6 + $0x1]]
          %v538 = vstv %s537
          %v539 = vmul.f32 %v538, %v389
          %v540 = vadd.f32 %v539, 0.0
          %s541 = sld [smem:[#allocation6 + $0x8]]
          %v542 = vstv %s541
          %v543 = vmul.f32 %v542, %v389
          %545 = vrot.lane.b32.xlu0 %v543, 112
          %v546 = vpop.permute.xlu0 %545
          %v547 = vrot.slane %v546, 1
          %v548 = vsel %vm400, %v546, %v547
          %v550 = vadd.f32 %v540, %v548
          %s551 = sld [smem:[#allocation6 + $0xf]]
          %v552 = vstv %s551
          %v553 = vmul.f32 %v552, %v389
          %555 = vrot.lane.b32.xlu0 %v553, 96
          %v556 = vpop.permute.xlu0 %555
          %v557 = vrot.slane %v556, 1
          %v558 = vsel %vm411, %v556, %v557
          %v560 = vadd.f32 %v550, %v558
          %s561 = sld [smem:[#allocation6 + $0x16]]
          %v562 = vstv %s561
          %v563 = vmul.f32 %v562, %v389
          %565 = vrot.lane.b32.xlu0 %v563, 80
          %v566 = vpop.permute.xlu0 %565
          %v567 = vrot.slane %v566, 1
          %v568 = vsel %vm422, %v566, %v567
          %v570 = vadd.f32 %v560, %v568
          %s571 = sld [smem:[#allocation6 + $0x1d]]
          %v572 = vstv %s571
          %v573 = vmul.f32 %v572, %v427
          %575 = vrot.lane.b32.xlu0 %v573, 64
          %v576 = vpop.permute.xlu0 %575
          %v577 = vrot.slane %v576, 7
          %v578 = vsel %vm434, %v577, %v576
          %v580 = vadd.f32 %v570, %v578
          %s581 = sld [smem:[#allocation6 + $0x24]]
          %v582 = vstv %s581
          %v583 = vmul.f32 %v582, %v427
          %585 = vrot.lane.b32.xlu0 %v583, 48
          %v586 = vpop.permute.xlu0 %585
          %v587 = vrot.slane %v586, 7
          %v588 = vsel %vm445, %v587, %v586
          %v590 = vadd.f32 %v580, %v588
          %s591 = sld [smem:[#allocation6 + $0x2b]]
          %v592 = vstv %s591
          %v593 = vmul.f32 %v592, %v427
          %595 = vrot.lane.b32.xlu0 %v593, 32
          %v596 = vpop.permute.xlu0 %595
          %v597 = vrot.slane %v596, 7
          %v598 = vsel %vm456, %v597, %v596
          %v600 = vadd.f32 %v590, %v598
          %s601 = sld [smem:[#allocation6 + $0x32]]
          %v602 = vstv %s601
          %v603 = vmul.f32 %v602, %v461
          %v604 = vadd.f32 %v600, %v603
          %s605 = sld [smem:[#allocation6 + $0x39]]
          %v606 = vstv %s605
          %v607 = vmul.f32 %v606, %v461
          %609 = vrot.lane.b32.xlu0 %v607, 112
          %v610 = vpop.permute.xlu0 %609
          %v611 = vrot.slane %v610, 1
          %v612 = vsel %vm400, %v610, %v611
          %v614 = vadd.f32 %v604, %v612
          %s615 = sld [smem:[#allocation6 + $0x40]]
          %v616 = vstv %s615
          %v617 = vmul.f32 %v616, %v461
          %619 = vrot.lane.b32.xlu0 %v617, 96
          %v620 = vpop.permute.xlu0 %619
          %v621 = vrot.slane %v620, 1
          %v622 = vsel %vm411, %v620, %v621
          %v624 = vadd.f32 %v614, %v622
          %s625 = sld [smem:[#allocation6 + $0x47]]
          %v626 = vstv %s625
          %v627 = vmul.f32 %v626, %v461
          %629 = vrot.lane.b32.xlu0 %v627, 80
          %v630 = vpop.permute.xlu0 %629
          %v631 = vrot.slane %v630, 1
          %v632 = vsel %vm422, %v630, %v631
          %v634 = vadd.f32 %v624, %v632
          %s635 = sld [smem:[#allocation6 + $0x4e]]
          %v636 = vstv %s635
          %v637 = vmul.f32 %v636, %v496
          %639 = vrot.lane.b32.xlu0 %v637, 64
          %v640 = vpop.permute.xlu0 %639
          %v641 = vrot.slane %v640, 7
          %v642 = vsel %vm434, %v641, %v640
          %v644 = vadd.f32 %v634, %v642
          %s645 = sld [smem:[#allocation6 + $0x55]]
          %v646 = vstv %s645
          %v647 = vmul.f32 %v646, %v496
          %649 = vrot.lane.b32.xlu0 %v647, 48
          %v650 = vpop.permute.xlu0 %649
          %v651 = vrot.slane %v650, 7
          %v652 = vsel %vm445, %v651, %v650
          %v654 = vadd.f32 %v644, %v652
          %s655 = sld [smem:[#allocation6 + $0x5c]]
          %v656 = vstv %s655
          %v657 = vmul.f32 %v656, %v496
          %659 = vrot.lane.b32.xlu0 %v657, 32
          %v660 = vpop.permute.xlu0 %659
          %v661 = vrot.slane %v660, 7
          %v662 = vsel %vm456, %v661, %v660
          %v664 = vadd.f32 %v654, %v662
          %666 = vrot.lane.b32.xlu0 %v664, 50
          %v667 = vpop.permute.xlu0 %666
          %v668 = vrot.slane %v667, 1
          %vm669 = vcmask 408576
          %v670 = vsel %vm669, %v667, %v668
          %v672 = vmul.f32 %v536, %v670
          %v673 = vadd.f32 %v534, %v672
          %s674 = scalar_lea.vmem %s3, 4
          %v675 = vld [vmem:[%s674] sm:$0x3]
          %s676 = sld [smem:[#allocation6 + $0x2]]
          %v677 = vstv %s676
          %v678 = vmul.f32 %v677, %v389
          %v679 = vadd.f32 %v678, 0.0
          %s680 = sld [smem:[#allocation6 + $0x9]]
          %v681 = vstv %s680
          %v682 = vmul.f32 %v681, %v389
          %684 = vrot.lane.b32.xlu0 %v682, 112
          %v685 = vpop.permute.xlu0 %684
          %v686 = vrot.slane %v685, 1
          %v687 = vsel %vm400, %v685, %v686
          %v689 = vadd.f32 %v679, %v687
          %s690 = sld [smem:[#allocation6 + $0x10]]
          %v691 = vstv %s690
          %v692 = vmul.f32 %v691, %v389
          %694 = vrot.lane.b32.xlu0 %v692, 96
          %v695 = vpop.permute.xlu0 %694
          %v696 = vrot.slane %v695, 1
          %v697 = vsel %vm411, %v695, %v696
          %v699 = vadd.f32 %v689, %v697
          %s700 = sld [smem:[#allocation6 + $0x17]]
          %v701 = vstv %s700
          %v702 = vmul.f32 %v701, %v389
          %704 = vrot.lane.b32.xlu0 %v702, 80
          %v705 = vpop.permute.xlu0 %704
          %v706 = vrot.slane %v705, 1
          %v707 = vsel %vm422, %v705, %v706
          %v709 = vadd.f32 %v699, %v707
          %s710 = sld [smem:[#allocation6 + $0x1e]]
          %v711 = vstv %s710
          %v712 = vmul.f32 %v711, %v427
          %714 = vrot.lane.b32.xlu0 %v712, 64
          %v715 = vpop.permute.xlu0 %714
          %v716 = vrot.slane %v715, 7
          %v717 = vsel %vm434, %v716, %v715
          %v719 = vadd.f32 %v709, %v717
          %s720 = sld [smem:[#allocation6 + $0x25]]
          %v721 = vstv %s720
          %v722 = vmul.f32 %v721, %v427
          %724 = vrot.lane.b32.xlu0 %v722, 48
          %v725 = vpop.permute.xlu0 %724
          %v726 = vrot.slane %v725, 7
          %v727 = vsel %vm445, %v726, %v725
          %v729 = vadd.f32 %v719, %v727
          %s730 = sld [smem:[#allocation6 + $0x2c]]
          %v731 = vstv %s730
          %v732 = vmul.f32 %v731, %v427
          %734 = vrot.lane.b32.xlu0 %v732, 32
          %v735 = vpop.permute.xlu0 %734
          %v736 = vrot.slane %v735, 7
          %v737 = vsel %vm456, %v736, %v735
          %v739 = vadd.f32 %v729, %v737
          %s740 = sld [smem:[#allocation6 + $0x33]]
          %v741 = vstv %s740
          %v742 = vmul.f32 %v741, %v461
          %v743 = vadd.f32 %v739, %v742
          %s744 = sld [smem:[#allocation6 + $0x3a]]
          %v745 = vstv %s744
          %v746 = vmul.f32 %v745, %v461
          %748 = vrot.lane.b32.xlu0 %v746, 112
          %v749 = vpop.permute.xlu0 %748
          %v750 = vrot.slane %v749, 1
          %v751 = vsel %vm400, %v749, %v750
          %v753 = vadd.f32 %v743, %v751
          %s754 = sld [smem:[#allocation6 + $0x41]]
          %v755 = vstv %s754
          %v756 = vmul.f32 %v755, %v461
          %758 = vrot.lane.b32.xlu0 %v756, 96
          %v759 = vpop.permute.xlu0 %758
          %v760 = vrot.slane %v759, 1
          %v761 = vsel %vm411, %v759, %v760
          %v763 = vadd.f32 %v753, %v761
          %s764 = sld [smem:[#allocation6 + $0x48]]
          %v765 = vstv %s764
          %v766 = vmul.f32 %v765, %v461
          %768 = vrot.lane.b32.xlu0 %v766, 80
          %v769 = vpop.permute.xlu0 %768
          %v770 = vrot.slane %v769, 1
          %v771 = vsel %vm422, %v769, %v770
          %v773 = vadd.f32 %v763, %v771
          %s774 = sld [smem:[#allocation6 + $0x4f]]
          %v775 = vstv %s774
          %v776 = vmul.f32 %v775, %v496
          %778 = vrot.lane.b32.xlu0 %v776, 64
          %v779 = vpop.permute.xlu0 %778
          %v780 = vrot.slane %v779, 7
          %v781 = vsel %vm434, %v780, %v779
          %v783 = vadd.f32 %v773, %v781
          %s784 = sld [smem:[#allocation6 + $0x56]]
          %v785 = vstv %s784
          %v786 = vmul.f32 %v785, %v496
          %788 = vrot.lane.b32.xlu0 %v786, 48
          %v789 = vpop.permute.xlu0 %788
          %v790 = vrot.slane %v789, 7
          %v791 = vsel %vm445, %v790, %v789
          %v793 = vadd.f32 %v783, %v791
          %s794 = sld [smem:[#allocation6 + $0x5d]]
          %v795 = vstv %s794
          %v796 = vmul.f32 %v795, %v496
          %798 = vrot.lane.b32.xlu0 %v796, 32
          %v799 = vpop.permute.xlu0 %798
          %v800 = vrot.slane %v799, 7
          %v801 = vsel %vm456, %v800, %v799
          %v803 = vadd.f32 %v793, %v801
          %805 = vrot.lane.b32.xlu0 %v803, 49
          %v806 = vpop.permute.xlu0 %805
          %v807 = vrot.slane %v806, 1
          %vm808 = vcmask 400384
          %v809 = vsel %vm808, %v806, %v807
          %v811 = vmul.f32 %v675, %v809
          %v812 = vadd.f32 %v673, %v811
          %s813 = scalar_lea.vmem %s3, 6
          %v814 = vld [vmem:[%s813] sm:$0x3]
          %s815 = sld [smem:[#allocation6 + $0x3]]
          %v816 = vstv %s815
          %v817 = vmul.f32 %v816, %v389
          %v818 = vadd.f32 %v817, 0.0
          %s819 = sld [smem:[#allocation6 + $0xa]]
          %v820 = vstv %s819
          %v821 = vmul.f32 %v820, %v389
          %823 = vrot.lane.b32.xlu0 %v821, 112
          %v824 = vpop.permute.xlu0 %823
          %v825 = vrot.slane %v824, 1
          %v826 = vsel %vm400, %v824, %v825
          %v828 = vadd.f32 %v818, %v826
          %s829 = sld [smem:[#allocation6 + $0x11]]
          %v830 = vstv %s829
          %v831 = vmul.f32 %v830, %v389
          %833 = vrot.lane.b32.xlu0 %v831, 96
          %v834 = vpop.permute.xlu0 %833
          %v835 = vrot.slane %v834, 1
          %v836 = vsel %vm411, %v834, %v835
          %v838 = vadd.f32 %v828, %v836
          %s839 = sld [smem:[#allocation6 + $0x18]]
          %v840 = vld [vmem:[#allocation4 + $0x1] sm:$0x3]
          %v841 = vstv %s839
          %v842 = vmul.f32 %v841, %v840
          %844 = vrot.lane.b32.xlu0 %v842, 80
          %v845 = vpop.permute.xlu0 %844
          %v846 = vrot.slane %v845, 7
          %v847 = vsel %vm422, %v846, %v845
          %v849 = vadd.f32 %v838, %v847
          %s850 = sld [smem:[#allocation6 + $0x1f]]
          %v851 = vstv %s850
          %v852 = vmul.f32 %v851, %v427
          %854 = vrot.lane.b32.xlu0 %v852, 64
          %v855 = vpop.permute.xlu0 %854
          %v856 = vrot.slane %v855, 7
          %v857 = vsel %vm434, %v856, %v855
          %v859 = vadd.f32 %v849, %v857
          %s860 = sld [smem:[#allocation6 + $0x26]]
          %v861 = vstv %s860
          %v862 = vmul.f32 %v861, %v427
          %864 = vrot.lane.b32.xlu0 %v862, 48
          %v865 = vpop.permute.xlu0 %864
          %v866 = vrot.slane %v865, 7
          %v867 = vsel %vm445, %v866, %v865
          %v869 = vadd.f32 %v859, %v867
          %s870 = sld [smem:[#allocation6 + $0x2d]]
          %v871 = vstv %s870
          %v872 = vmul.f32 %v871, %v427
          %874 = vrot.lane.b32.xlu0 %v872, 32
          %v875 = vpop.permute.xlu0 %874
          %v876 = vrot.slane %v875, 7
          %v877 = vsel %vm456, %v876, %v875
          %v879 = vadd.f32 %v869, %v877
          %s880 = sld [smem:[#allocation6 + $0x34]]
          %v881 = vstv %s880
          %v882 = vmul.f32 %v881, %v461
          %v883 = vadd.f32 %v879, %v882
          %s884 = sld [smem:[#allocation6 + $0x3b]]
          %v885 = vstv %s884
          %v886 = vmul.f32 %v885, %v461
          %888 = vrot.lane.b32.xlu0 %v886, 112
          %v889 = vpop.permute.xlu0 %888
          %v890 = vrot.slane %v889, 1
          %v891 = vsel %vm400, %v889, %v890
          %v893 = vadd.f32 %v883, %v891
          %s894 = sld [smem:[#allocation6 + $0x42]]
          %v895 = vstv %s894
          %v896 = vmul.f32 %v895, %v461
          %898 = vrot.lane.b32.xlu0 %v896, 96
          %v899 = vpop.permute.xlu0 %898
          %v900 = vrot.slane %v899, 1
          %v901 = vsel %vm411, %v899, %v900
          %v903 = vadd.f32 %v893, %v901
          %s904 = sld [smem:[#allocation6 + $0x49]]
          %v905 = vld [vmem:[%s375 + $0x1] sm:$0x3]
          %v906 = vstv %s904
          %v907 = vmul.f32 %v906, %v905
          %909 = vrot.lane.b32.xlu0 %v907, 80
          %v910 = vpop.permute.xlu0 %909
          %v911 = vrot.slane %v910, 7
          %v912 = vsel %vm422, %v911, %v910
          %v914 = vadd.f32 %v903, %v912
          %s915 = sld [smem:[#allocation6 + $0x50]]
          %v916 = vstv %s915
          %v917 = vmul.f32 %v916, %v496
          %919 = vrot.lane.b32.xlu0 %v917, 64
          %v920 = vpop.permute.xlu0 %919
          %v921 = vrot.slane %v920, 7
          %v922 = vsel %vm434, %v921, %v920
          %v924 = vadd.f32 %v914, %v922
          %s925 = sld [smem:[#allocation6 + $0x57]]
          %v926 = vstv %s925
          %v927 = vmul.f32 %v926, %v496
          %929 = vrot.lane.b32.xlu0 %v927, 48
          %v930 = vpop.permute.xlu0 %929
          %v931 = vrot.slane %v930, 7
          %v932 = vsel %vm445, %v931, %v930
          %v934 = vadd.f32 %v924, %v932
          %s935 = sld [smem:[#allocation6 + $0x5e]]
          %v936 = vstv %s935
          %v937 = vmul.f32 %v936, %v496
          %939 = vrot.lane.b32.xlu0 %v937, 32
          %v940 = vpop.permute.xlu0 %939
          %v941 = vrot.slane %v940, 7
          %v942 = vsel %vm456, %v941, %v940
          %v944 = vadd.f32 %v934, %v942
          %946 = vrot.lane.b32.xlu0 %v944, 48
          %v947 = vpop.permute.xlu0 %946
          %v948 = vrot.slane %v947, 1
          %v949 = vsel %vm445, %v947, %v948
          %v951 = vmul.f32 %v814, %v949
          %v952 = vadd.f32 %v812, %v951
          %s953 = scalar_lea.vmem %s3, 8
          %v954 = vld [vmem:[%s953] sm:$0x3]
          %s955 = sld [smem:[#allocation6 + $0x4]]
          %v956 = vstv %s955
          %v957 = vmul.f32 %v956, %v389
          %v958 = vadd.f32 %v957, 0.0
          %s959 = sld [smem:[#allocation6 + $0xb]]
          %v960 = vstv %s959
          %v961 = vmul.f32 %v960, %v389
          %963 = vrot.lane.b32.xlu0 %v961, 112
          %v964 = vpop.permute.xlu0 %963
          %v965 = vrot.slane %v964, 1
          %v966 = vsel %vm400, %v964, %v965
          %v968 = vadd.f32 %v958, %v966
          %s969 = sld [smem:[#allocation6 + $0x12]]
          %v970 = vstv %s969
          %v971 = vmul.f32 %v970, %v389
          %973 = vrot.lane.b32.xlu0 %v971, 96
          %v974 = vpop.permute.xlu0 %973
          %v975 = vrot.slane %v974, 1
          %v976 = vsel %vm411, %v974, %v975
          %v978 = vadd.f32 %v968, %v976
          %s979 = sld [smem:[#allocation6 + $0x19]]
          %v980 = vstv %s979
          %v981 = vmul.f32 %v980, %v427
          %983 = vrot.lane.b32.xlu0 %v981, 80
          %v984 = vpop.permute.xlu0 %983
          %v985 = vrot.slane %v984, 7
          %v986 = vsel %vm422, %v985, %v984
          %v988 = vadd.f32 %v978, %v986
          %s989 = sld [smem:[#allocation6 + $0x20]]
          %v990 = vstv %s989
          %v991 = vmul.f32 %v990, %v427
          %993 = vrot.lane.b32.xlu0 %v991, 64
          %v994 = vpop.permute.xlu0 %993
          %v995 = vrot.slane %v994, 7
          %v996 = vsel %vm434, %v995, %v994
          %v998 = vadd.f32 %v988, %v996
          %s999 = sld [smem:[#allocation6 + $0x27]]
          %v1000 = vstv %s999
          %v1001 = vmul.f32 %v1000, %v427
          %1003 = vrot.lane.b32.xlu0 %v1001, 48
          %v1004 = vpop.permute.xlu0 %1003
          %v1005 = vrot.slane %v1004, 7
          %v1006 = vsel %vm445, %v1005, %v1004
          %v1008 = vadd.f32 %v998, %v1006
          %s1009 = sld [smem:[#allocation6 + $0x2e]]
          %v1010 = vstv %s1009
          %v1011 = vmul.f32 %v1010, %v427
          %1013 = vrot.lane.b32.xlu0 %v1011, 32
          %v1014 = vpop.permute.xlu0 %1013
          %v1015 = vrot.slane %v1014, 7
          %v1016 = vsel %vm456, %v1015, %v1014
          %v1018 = vadd.f32 %v1008, %v1016
          %s1019 = sld [smem:[#allocation6 + $0x35]]
          %v1020 = vstv %s1019
          %v1021 = vmul.f32 %v1020, %v461
          %v1022 = vadd.f32 %v1018, %v1021
          %s1023 = sld [smem:[#allocation6 + $0x3c]]
          %v1024 = vstv %s1023
          %v1025 = vmul.f32 %v1024, %v461
          %1027 = vrot.lane.b32.xlu0 %v1025, 112
          %v1028 = vpop.permute.xlu0 %1027
          %v1029 = vrot.slane %v1028, 1
          %v1030 = vsel %vm400, %v1028, %v1029
          %v1032 = vadd.f32 %v1022, %v1030
          %s1033 = sld [smem:[#allocation6 + $0x43]]
          %v1034 = vstv %s1033
          %v1035 = vmul.f32 %v1034, %v461
          %1037 = vrot.lane.b32.xlu0 %v1035, 96
          %v1038 = vpop.permute.xlu0 %1037
          %v1039 = vrot.slane %v1038, 1
          %v1040 = vsel %vm411, %v1038, %v1039
          %v1042 = vadd.f32 %v1032, %v1040
          %s1043 = sld [smem:[#allocation6 + $0x4a]]
          %v1044 = vstv %s1043
          %v1045 = vmul.f32 %v1044, %v496
          %1047 = vrot.lane.b32.xlu0 %v1045, 80
          %v1048 = vpop.permute.xlu0 %1047
          %v1049 = vrot.slane %v1048, 7
          %v1050 = vsel %vm422, %v1049, %v1048
          %v1052 = vadd.f32 %v1042, %v1050
          %s1053 = sld [smem:[#allocation6 + $0x51]]
          %v1054 = vstv %s1053
          %v1055 = vmul.f32 %v1054, %v496
          %1057 = vrot.lane.b32.xlu0 %v1055, 64
          %v1058 = vpop.permute.xlu0 %1057
          %v1059 = vrot.slane %v1058, 7
          %v1060 = vsel %vm434, %v1059, %v1058
          %v1062 = vadd.f32 %v1052, %v1060
          %s1063 = sld [smem:[#allocation6 + $0x58]]
          %v1064 = vstv %s1063
          %v1065 = vmul.f32 %v1064, %v496
          %1067 = vrot.lane.b32.xlu0 %v1065, 48
          %v1068 = vpop.permute.xlu0 %1067
          %v1069 = vrot.slane %v1068, 7
          %v1070 = vsel %vm445, %v1069, %v1068
          %v1072 = vadd.f32 %v1062, %v1070
          %s1073 = sld [smem:[#allocation6 + $0x5f]]
          %v1074 = vstv %s1073
          %v1075 = vmul.f32 %v1074, %v496
          %1077 = vrot.lane.b32.xlu0 %v1075, 32
          %v1078 = vpop.permute.xlu0 %1077
          %v1079 = vrot.slane %v1078, 7
          %v1080 = vsel %vm456, %v1079, %v1078
          %v1082 = vadd.f32 %v1072, %v1080
          %1084 = vrot.lane.b32.xlu0 %v1082, 47
          %v1085 = vpop.permute.xlu0 %1084
          %v1086 = vrot.slane %v1085, 1
          %vm1087 = vcmask 384000
          %v1088 = vsel %vm1087, %v1085, %v1086
          %v1090 = vmul.f32 %v954, %v1088
          %v1091 = vadd.f32 %v952, %v1090
          %s1092 = scalar_lea.vmem %s3, 10
          %v1093 = vld [vmem:[%s1092] sm:$0x3]
          %s1094 = sld [smem:[#allocation6 + $0x5]]
          %v1095 = vstv %s1094
          %v1096 = vmul.f32 %v1095, %v389
          %v1097 = vadd.f32 %v1096, 0.0
          %s1098 = sld [smem:[#allocation6 + $0xc]]
          %v1099 = vstv %s1098
          %v1100 = vmul.f32 %v1099, %v389
          %1102 = vrot.lane.b32.xlu0 %v1100, 112
          %v1103 = vpop.permute.xlu0 %1102
          %v1104 = vrot.slane %v1103, 1
          %v1105 = vsel %vm400, %v1103, %v1104
          %v1107 = vadd.f32 %v1097, %v1105
          %s1108 = sld [smem:[#allocation6 + $0x13]]
          %v1109 = vstv %s1108
          %v1110 = vmul.f32 %v1109, %v389
          %1112 = vrot.lane.b32.xlu0 %v1110, 96
          %v1113 = vpop.permute.xlu0 %1112
          %v1114 = vrot.slane %v1113, 1
          %v1115 = vsel %vm411, %v1113, %v1114
          %v1117 = vadd.f32 %v1107, %v1115
          %s1118 = sld [smem:[#allocation6 + $0x1a]]
          %v1119 = vstv %s1118
          %v1120 = vmul.f32 %v1119, %v427
          %1122 = vrot.lane.b32.xlu0 %v1120, 80
          %v1123 = vpop.permute.xlu0 %1122
          %v1124 = vrot.slane %v1123, 7
          %v1125 = vsel %vm422, %v1124, %v1123
          %v1127 = vadd.f32 %v1117, %v1125
          %s1128 = sld [smem:[#allocation6 + $0x21]]
          %v1129 = vstv %s1128
          %v1130 = vmul.f32 %v1129, %v427
          %1132 = vrot.lane.b32.xlu0 %v1130, 64
          %v1133 = vpop.permute.xlu0 %1132
          %v1134 = vrot.slane %v1133, 7
          %v1135 = vsel %vm434, %v1134, %v1133
          %v1137 = vadd.f32 %v1127, %v1135
          %s1138 = sld [smem:[#allocation6 + $0x28]]
          %v1139 = vstv %s1138
          %v1140 = vmul.f32 %v1139, %v427
          %1142 = vrot.lane.b32.xlu0 %v1140, 48
          %v1143 = vpop.permute.xlu0 %1142
          %v1144 = vrot.slane %v1143, 7
          %v1145 = vsel %vm445, %v1144, %v1143
          %v1147 = vadd.f32 %v1137, %v1145
          %s1148 = sld [smem:[#allocation6 + $0x2f]]
          %v1149 = vstv %s1148
          %v1150 = vmul.f32 %v1149, %v427
          %1152 = vrot.lane.b32.xlu0 %v1150, 32
          %v1153 = vpop.permute.xlu0 %1152
          %v1154 = vrot.slane %v1153, 7
          %v1155 = vsel %vm456, %v1154, %v1153
          %v1157 = vadd.f32 %v1147, %v1155
          %s1158 = sld [smem:[#allocation6 + $0x36]]
          %v1159 = vstv %s1158
          %v1160 = vmul.f32 %v1159, %v461
          %v1161 = vadd.f32 %v1157, %v1160
          %s1162 = sld [smem:[#allocation6 + $0x3d]]
          %v1163 = vstv %s1162
          %v1164 = vmul.f32 %v1163, %v461
          %1166 = vrot.lane.b32.xlu0 %v1164, 112
          %v1167 = vpop.permute.xlu0 %1166
          %v1168 = vrot.slane %v1167, 1
          %v1169 = vsel %vm400, %v1167, %v1168
          %v1171 = vadd.f32 %v1161, %v1169
          %s1172 = sld [smem:[#allocation6 + $0x44]]
          %v1173 = vstv %s1172
          %v1174 = vmul.f32 %v1173, %v461
          %1176 = vrot.lane.b32.xlu0 %v1174, 96
          %v1177 = vpop.permute.xlu0 %1176
          %v1178 = vrot.slane %v1177, 1
          %v1179 = vsel %vm411, %v1177, %v1178
          %v1181 = vadd.f32 %v1171, %v1179
          %s1182 = sld [smem:[#allocation6 + $0x4b]]
          %v1183 = vstv %s1182
          %v1184 = vmul.f32 %v1183, %v496
          %1186 = vrot.lane.b32.xlu0 %v1184, 80
          %v1187 = vpop.permute.xlu0 %1186
          %v1188 = vrot.slane %v1187, 7
          %v1189 = vsel %vm422, %v1188, %v1187
          %v1191 = vadd.f32 %v1181, %v1189
          %s1192 = sld [smem:[#allocation6 + $0x52]]
          %v1193 = vstv %s1192
          %v1194 = vmul.f32 %v1193, %v496
          %1196 = vrot.lane.b32.xlu0 %v1194, 64
          %v1197 = vpop.permute.xlu0 %1196
          %v1198 = vrot.slane %v1197, 7
          %v1199 = vsel %vm434, %v1198, %v1197
          %v1201 = vadd.f32 %v1191, %v1199
          %s1202 = sld [smem:[#allocation6 + $0x59]]
          %v1203 = vstv %s1202
          %v1204 = vmul.f32 %v1203, %v496
          %1206 = vrot.lane.b32.xlu0 %v1204, 48
          %v1207 = vpop.permute.xlu0 %1206
          %v1208 = vrot.slane %v1207, 7
          %v1209 = vsel %vm445, %v1208, %v1207
          %v1211 = vadd.f32 %v1201, %v1209
          %s1212 = sld [smem:[#allocation6 + $0x60]]
          %v1213 = vstv %s1212
          %v1214 = vmul.f32 %v1213, %v496
          %1216 = vrot.lane.b32.xlu0 %v1214, 32
          %v1217 = vpop.permute.xlu0 %1216
          %v1218 = vrot.slane %v1217, 7
          %v1219 = vsel %vm456, %v1218, %v1217
          %v1221 = vadd.f32 %v1211, %v1219
          %1223 = vrot.lane.b32.xlu0 %v1221, 46
          %v1224 = vpop.permute.xlu0 %1223
          %v1225 = vrot.slane %v1224, 1
          %vm1226 = vcmask 375808
          %v1227 = vsel %vm1226, %v1224, %v1225
          %v1229 = vmul.f32 %v1093, %v1227
          %v1230 = vadd.f32 %v1091, %v1229
          %s1231 = scalar_lea.vmem %s3, 12
          %v1232 = vld [vmem:[%s1231] sm:$0x3]
          %s1233 = sld [smem:[#allocation6 + $0x6]]
          %v1234 = vstv %s1233
          %v1235 = vmul.f32 %v1234, %v389
          %v1236 = vadd.f32 %v1235, 0.0
          %s1237 = sld [smem:[#allocation6 + $0xd]]
          %v1238 = vstv %s1237
          %v1239 = vmul.f32 %v1238, %v389
          %1241 = vrot.lane.b32.xlu0 %v1239, 112
          %v1242 = vpop.permute.xlu0 %1241
          %v1243 = vrot.slane %v1242, 1
          %v1244 = vsel %vm400, %v1242, %v1243
          %v1246 = vadd.f32 %v1236, %v1244
          %s1247 = sld [smem:[#allocation6 + $0x14]]
          %v1248 = vstv %s1247
          %v1249 = vmul.f32 %v1248, %v389
          %1251 = vrot.lane.b32.xlu0 %v1249, 96
          %v1252 = vpop.permute.xlu0 %1251
          %v1253 = vrot.slane %v1252, 1
          %v1254 = vsel %vm411, %v1252, %v1253
          %v1256 = vadd.f32 %v1246, %v1254
          %s1257 = sld [smem:[#allocation6 + $0x1b]]
          %v1258 = vstv %s1257
          %v1259 = vmul.f32 %v1258, %v427
          %1261 = vrot.lane.b32.xlu0 %v1259, 80
          %v1262 = vpop.permute.xlu0 %1261
          %v1263 = vrot.slane %v1262, 7
          %v1264 = vsel %vm422, %v1263, %v1262
          %v1266 = vadd.f32 %v1256, %v1264
          %s1267 = sld [smem:[#allocation6 + $0x22]]
          %v1268 = vstv %s1267
          %v1269 = vmul.f32 %v1268, %v427
          %1271 = vrot.lane.b32.xlu0 %v1269, 64
          %v1272 = vpop.permute.xlu0 %1271
          %v1273 = vrot.slane %v1272, 7
          %v1274 = vsel %vm434, %v1273, %v1272
          %v1276 = vadd.f32 %v1266, %v1274
          %s1277 = sld [smem:[#allocation6 + $0x29]]
          %v1278 = vstv %s1277
          %v1279 = vmul.f32 %v1278, %v427
          %1281 = vrot.lane.b32.xlu0 %v1279, 48
          %v1282 = vpop.permute.xlu0 %1281
          %v1283 = vrot.slane %v1282, 7
          %v1284 = vsel %vm445, %v1283, %v1282
          %v1286 = vadd.f32 %v1276, %v1284
          %s1287 = sld [smem:[#allocation6 + $0x30]]
          %v1288 = vstv %s1287
          %v1289 = vmul.f32 %v1288, %v427
          %1291 = vrot.lane.b32.xlu0 %v1289, 32
          %v1292 = vpop.permute.xlu0 %1291
          %v1293 = vrot.slane %v1292, 7
          %v1294 = vsel %vm456, %v1293, %v1292
          %v1296 = vadd.f32 %v1286, %v1294
          %s1297 = sld [smem:[#allocation6 + $0x37]]
          %v1298 = vstv %s1297
          %v1299 = vmul.f32 %v1298, %v461
          %v1300 = vadd.f32 %v1296, %v1299
          %s1301 = sld [smem:[#allocation6 + $0x3e]]
          %v1302 = vstv %s1301
          %v1303 = vmul.f32 %v1302, %v461
          %1305 = vrot.lane.b32.xlu0 %v1303, 112
          %v1306 = vpop.permute.xlu0 %1305
          %v1307 = vrot.slane %v1306, 1
          %v1308 = vsel %vm400, %v1306, %v1307
          %v1310 = vadd.f32 %v1300, %v1308
          %s1311 = sld [smem:[#allocation6 + $0x45]]
          %v1312 = vstv %s1311
          %v1313 = vmul.f32 %v1312, %v461
          %1315 = vrot.lane.b32.xlu0 %v1313, 96
          %v1316 = vpop.permute.xlu0 %1315
          %v1317 = vrot.slane %v1316, 1
          %v1318 = vsel %vm411, %v1316, %v1317
          %v1320 = vadd.f32 %v1310, %v1318
          %s1321 = sld [smem:[#allocation6 + $0x4c]]
          %v1322 = vstv %s1321
          %v1323 = vmul.f32 %v1322, %v496
          %1325 = vrot.lane.b32.xlu0 %v1323, 80
          %v1326 = vpop.permute.xlu0 %1325
          %v1327 = vrot.slane %v1326, 7
          %v1328 = vsel %vm422, %v1327, %v1326
          %v1330 = vadd.f32 %v1320, %v1328
          %s1331 = sld [smem:[#allocation6 + $0x53]]
          %v1332 = vstv %s1331
          %v1333 = vmul.f32 %v1332, %v496
          %1335 = vrot.lane.b32.xlu0 %v1333, 64
          %v1336 = vpop.permute.xlu0 %1335
          %v1337 = vrot.slane %v1336, 7
          %v1338 = vsel %vm434, %v1337, %v1336
          %v1340 = vadd.f32 %v1330, %v1338
          %s1341 = sld [smem:[#allocation6 + $0x5a]]
          %v1342 = vstv %s1341
          %v1343 = vmul.f32 %v1342, %v496
          %1345 = vrot.lane.b32.xlu0 %v1343, 48
          %v1346 = vpop.permute.xlu0 %1345
          %v1347 = vrot.slane %v1346, 7
          %v1348 = vsel %vm445, %v1347, %v1346
          %v1350 = vadd.f32 %v1340, %v1348
          %s1351 = sld [smem:[#allocation6 + $0x61]]
          %v1352 = vstv %s1351
          %v1353 = vmul.f32 %v1352, %v496
          %1355 = vrot.lane.b32.xlu0 %v1353, 32
          %v1356 = vpop.permute.xlu0 %1355
          %v1357 = vrot.slane %v1356, 7
          %v1358 = vsel %vm456, %v1357, %v1356
          %v1360 = vadd.f32 %v1350, %v1358
          %1362 = vrot.lane.b32.xlu0 %v1360, 45
          %v1363 = vpop.permute.xlu0 %1362
          %v1364 = vrot.slane %v1363, 1
          %vm1365 = vcmask 367616
          %v1366 = vsel %vm1365, %v1363, %v1364
          %v1368 = vmul.f32 %v1232, %v1366
          %v1369 = vadd.f32 %v1230, %v1368
          %v1370 = vxor.u32 %v1369, 2147483648
          %v1371 = vmul.f32 %v1370, 1.442695
          %v1372 = vpow.pop %v1371
          %v1373 = vadd.f32 %v1372, 1.0
          %v1374 = vrcp.pop %v1373
          %v1375 = vmul.f32 1.0, %v1374
          %1376 = vst.msk [vmem:[%s236] sm:$0x3] %vm381, %v1375
        $region52: #{spatial_attention.1} parent=35 // pred_fallthru
          _
        %p1377 = scmp.lt.s32.totalorder %s21, 1
        %s1378 = scalar_select %p1377, %s21, 1
        %s1379 = smul.addr %s1378, 2
        %s1380 = scalar_lea.vmem %s4, %s1379
        // Predicated region
        $region53: #{spatial_attention.1} parent=35 // pred_check
          %p1381 = pneg %p138
        $region54: #{spatial_attention.1} parent=35 // pred_check_branch
          %1383 = sbr.rel (%p1381) target = $region56
        $region55: #{spatial_attention.1} parent=35 // pred_region
          _
        $region56: #{spatial_attention.1} parent=35 // pred_fallthru
          _
      $region36: #{spatial_attention.1} parent=5 // pred_fallthru
        _
      %p1384 = scmp.le.s32.totalorder 2, %s12
      // Predicated region
      $region57: #{spatial_attention.1} parent=5 // pred_check
        %p1385 = pneg %p1384
      $region58: #{spatial_attention.1} parent=5 // pred_check_branch
        %1387 = sbr.rel (%p1385) target = $region60
      $region59: #{spatial_attention.1} parent=5 // pred_region
        %s1388 = ssub.s32 %s12, 2
        // Predicated region
        $region61: #{spatial_attention.1} parent=59 // pred_check
          %p1389 = pneg %p144
        $region62: #{spatial_attention.1} parent=59 // pred_check_branch
          %1391 = sbr.rel (%p1389) target = $region64
        $region63: #{spatial_attention.1} parent=59 // pred_region
          %p1392 = scmp.lt.s32.totalorder %s23, 1
          %s1393 = scalar_select %p1392, %s23, 1
          %s1394 = smul.addr %s1393, 2
          %s1395 = scalar_lea.vmem %s4, %s1394
        $region64: #{spatial_attention.1} parent=59 // pred_fallthru
          _
      $region60: #{spatial_attention.1} parent=5 // pred_fallthru
        _
    $region6: #{spatial_attention.1} parent=1 // loop_footer
      %s16 = sadd.s32 1, %s12
    $region7: #{spatial_attention.1} parent=1 // loop_footer_branch
      %11 = sbr.rel target = $region3
    $region8: #{spatial_attention.1} parent=1 // loop_exit
      _
    %1396 = vsyncpa [#allocation7], 1
    %s1397 = scalar_lea.sflag [#allocation7], 1
    %1398 = vsyncpa %s1397, 1

</llo_original>
